<compile_context>
chip_gen: v6e
topology: v6e:2x2x1
jax: 0.10.0
libtpu: 0.0.40
codegen_flags: <defaults>
</compile_context>

<pallas_src>
import jax
import jax.numpy as jnp
from jax.experimental import pallas as pl
from jax.experimental.pallas import tpu as pltpu

BN_EPS = 1e-5
CLS_PAD = 128   # lane-dense padded width of the classifier output


# --------------------------------------------------------------------------- #
# Kernel 1: streaming encoder (pointwise VPU MACs + per-batch running max)
# --------------------------------------------------------------------------- #
def _make_encoder_kernel(B, C_in):
    def kernel(x_ref, weT_ref, be_ref, gT_ref, acc_ref):
        # x_ref:   (B, C_in, CN)  points of this N-chunk, lane-dense
        # weT_ref: (D, C_in)      encoder weight, transposed
        # be_ref:  (D, 1)         encoder bias (column)
        # gT_ref:  (D, B)         output global feature (transposed)
        # acc_ref: (D, B)         running max over points (VMEM scratch)
        j = pl.program_id(0)

        @pl.when(j == 0)
        def _init():
            acc_ref[...] = jnp.full_like(acc_ref, -jnp.inf)

        weT = weT_ref[...]                                   # (D, C_in)
        # Static unroll over batch rows (B is a small static int for point-cloud
        # classification; for very large B this should become a lax.fori_loop).
        for b in range(B):
            xb = x_ref[b]                                    # (C_in, CN)
            # 3-term VPU broadcast MAC instead of a K=3 MXU matmul.
            f = weT[:, 0:1] * xb[0:1, :]                     # (D, CN)
            for c in range(1, C_in):
                f = f + weT[:, c:c+1] * xb[c:c+1, :]
            m = jnp.max(f, axis=1, keepdims=True)            # (D, 1) chunk max
            acc_ref[:, b:b+1] = jnp.maximum(acc_ref[:, b:b+1], m)

        @pl.when(j == pl.num_programs(0) - 1)
        def _finalize():
            # bias is constant over points and relu is monotone, so both fold
            # into the final step:  relu(max_n(x W) + b) == max_n(relu(x W + b))
            gT_ref[...] = jnp.maximum(acc_ref[...] + be_ref[...], 0.0)

    return kernel


# --------------------------------------------------------------------------- #
# Kernel 2: classifier head (BN folded), one pass over the whole batch
# --------------------------------------------------------------------------- #
def _make_head_kernel(H, cls_pad):
    def kernel(g_ref, w1_ref, w2_ref, w3_ref, bias_ref, o_ref):
        biases = bias_ref[...]                               # (3, maxw) packed
        b1 = biases[0:1, :H]
        b2 = biases[1:2, :H]
        b3 = biases[2:3, :cls_pad]
        h = jnp.dot(g_ref[...], w1_ref[...], preferred_element_type=jnp.float32) + b1
        h = jnp.maximum(h, 0.0)
        h = jnp.dot(h, w2_ref[...], preferred_element_type=jnp.float32) + b2
        h = jnp.maximum(h, 0.0)
        out = jnp.dot(h, w3_ref[...], preferred_element_type=jnp.float32) + b3
        o_ref[...] = out.astype(o_ref.dtype)                 # (TBH, cls_pad)

    return kernel


def _chunk_points(N):
    # Lane-dense point chunk: 128 keeps the per-batch-row working set at
    # ~16 vregs (no spill); fall back to the full N if it is not 128-divisible.
    return 128 if N % 128 == 0 else N


def _head_tile(B):
    if B <= 512:
        return B
    for tb in (512, 256, 128):
        if B % tb == 0:
            return tb
    return B


def point_byol_classifier_forward(x, params):
    """x: (B, N, C_in) float32; params: dict of arrays. Returns (B, cls_dim)."""
    B, N, C_in = x.shape
    D = params["we"].shape[1]
    H = params["w1"].shape[1]
    cls_dim = params["w3"].shape[1]
    assert cls_dim <= CLS_PAD

    # ---- wrapper-side prep (plain XLA, outside the kernels) ----------------
    # Fold BatchNorm (running stats, eval mode) into the preceding Linear:
    #   BN(x@W + b) = x@(W*s) + (b - m)*s + beta,  s = gamma * rsqrt(var + eps)
    s1 = params["g1"] * jax.lax.rsqrt(params["v1"] + BN_EPS)
    w1f = params["w1"] * s1
    b1f = (params["b1"] - params["m1"]) * s1 + params["bt1"]
    s2 = params["g2"] * jax.lax.rsqrt(params["v2"] + BN_EPS)
    w2f = params["w2"] * s2
    b2f = (params["b2"] - params["m2"]) * s2 + params["bt2"]

    # Lane-dense head output: zero-pad the final linear to CLS_PAD columns.
    w3p = jnp.pad(params["w3"], ((0, 0), (0, CLS_PAD - cls_dim)))
    b3p = jnp.pad(params["b3"], ((0, 0), (0, CLS_PAD - cls_dim)))

    maxw = max(H, CLS_PAD)

    def _pad_row(v):
        return jnp.pad(v, ((0, 0), (0, maxw - v.shape[1])))

    bias_pack = jnp.concatenate([_pad_row(b1f), _pad_row(b2f), _pad_row(b3p)],
                                axis=0)                      # (3, maxw)

    # Repack x so the big point axis is lane-dense: (B, N, C) -> (B, C, N).
    x_bcn = jnp.transpose(x, (0, 2, 1))
    weT = params["we"].T                                     # (D, C_in)
    beT = params["be"].T                                     # (D, 1)

    # ---- kernel 1: streaming encoder --------------------------------------
    CN = _chunk_points(N)
    n_chunks = N // CN

    gT = pl.pallas_call(
        _make_encoder_kernel(B, C_in),
        out_shape=jax.ShapeDtypeStruct((D, B), jnp.float32),
        grid=(n_chunks,),
        in_specs=[
            pl.BlockSpec((B, C_in, CN), lambda j: (0, 0, j)),   # point chunk
            pl.BlockSpec((D, C_in), lambda j: (0, 0)),          # weT
            pl.BlockSpec((D, 1), lambda j: (0, 0)),             # be column
        ],
        out_specs=pl.BlockSpec((D, B), lambda j: (0, 0)),
        scratch_shapes=[pltpu.VMEM((D, B), jnp.float32)],
        compiler_params=pltpu.CompilerParams(
            dimension_semantics=("arbitrary",),                 # N-chunk reduction
        ),
    )(x_bcn, weT, beT)

    g = gT.T                                                    # (B, D) feature

    # ---- kernel 2: classifier head, single pass over the batch -------------
    TBH = _head_tile(B)
    out_padded = pl.pallas_call(
        _make_head_kernel(H, CLS_PAD),
        out_shape=jax.ShapeDtypeStruct((B, CLS_PAD), jnp.float32),
        grid=(B // TBH,),
        in_specs=[
            pl.BlockSpec((TBH, D), lambda i: (i, 0)),           # g batch tile
            pl.BlockSpec((D, H), lambda i: (0, 0)),             # w1 (BN folded)
            pl.BlockSpec((H, H), lambda i: (0, 0)),             # w2 (BN folded)
            pl.BlockSpec((H, CLS_PAD), lambda i: (0, 0)),       # w3 (lane padded)
            pl.BlockSpec((3, maxw), lambda i: (0, 0)),          # packed biases
        ],
        out_specs=pl.BlockSpec((TBH, CLS_PAD), lambda i: (i, 0)),
        compiler_params=pltpu.CompilerParams(
            dimension_semantics=("parallel",),
        ),
    )(g, w1f, w2f, w3p, bias_pack)

    return out_padded[:, :cls_dim]


# --------------------------------------------------------------------------- #
# Parameters + pure-JAX reference
# --------------------------------------------------------------------------- #
def init_params(key, c_in, enc_dim, hidden, cls_dim):
    ks = jax.random.split(key, 10)
    std = 0.02
    p = {
        # encoder pointwise linear
        "we": jax.random.normal(ks[0], (c_in, enc_dim), jnp.float32) * std,
        "be": jnp.zeros((1, enc_dim), jnp.float32),
        # head linear 1 + BN1 (non-trivial running stats to exercise the fold)
        "w1": jax.random.normal(ks[1], (enc_dim, hidden), jnp.float32) * std,
        "b1": jnp.zeros((1, hidden), jnp.float32),
        "g1": 1.0 + 0.1 * jax.random.normal(ks[4], (1, hidden), jnp.float32),
        "bt1": 0.1 * jax.random.normal(ks[5], (1, hidden), jnp.float32),
        "m1": 0.1 * jax.random.normal(ks[6], (1, hidden), jnp.float32),
        "v1": jax.random.uniform(ks[7], (1, hidden), jnp.float32, 0.5, 1.5),
        # head linear 2 + BN2
        "w2": jax.random.normal(ks[2], (hidden, hidden), jnp.float32) * std,
        "b2": jnp.zeros((1, hidden), jnp.float32),
        "g2": 1.0 + 0.1 * jax.random.normal(ks[8], (1, hidden), jnp.float32),
        "bt2": 0.1 * jax.random.normal(ks[9], (1, hidden), jnp.float32),
        "m2": 0.05 * jnp.ones((1, hidden), jnp.float32),
        "v2": 0.9 * jnp.ones((1, hidden), jnp.float32),
        # head linear 3
        "w3": jax.random.normal(ks[3], (hidden, cls_dim), jnp.float32) * std,
        "b3": jnp.zeros((1, cls_dim), jnp.float32),
    }
    return p


def reference_forward(x, p):
    feat = jnp.maximum(jnp.einsum("bnc,cd->bnd", x, p["we"]) + p["be"][None], 0.0)
    g = jnp.max(feat, axis=1)
    h = g @ p["w1"] + p["b1"]
    h = (h - p["m1"]) / jnp.sqrt(p["v1"] + BN_EPS) * p["g1"] + p["bt1"]
    h = jnp.maximum(h, 0.0)
    h = h @ p["w2"] + p["b2"]
    h = (h - p["m2"]) / jnp.sqrt(p["v2"] + BN_EPS) * p["g2"] + p["bt2"]
    h = jnp.maximum(h, 0.0)
    return h @ p["w3"] + p["b3"]


if __name__ == "__main__":
    key = jax.random.PRNGKey(0)
    k_x, k_p = jax.random.split(key)

    B, N, C_IN = 8, 1024, 3    # 8 point clouds, 1024 xyz points each
    ENC_DIM = 128              # encoder.output_dim
    HIDDEN = 256               # head hidden size (fixed by the module)
    CLS_DIM = 40               # config.cls_dim (e.g. ModelNet40)

    x = jax.random.normal(k_x, (B, N, C_IN), jnp.float32)
    params = init_params(k_p, C_IN, ENC_DIM, HIDDEN, CLS_DIM)

    out = point_byol_classifier_forward(x, params)
    out = jax.block_until_ready(out)

    ref = reference_forward(x, params)
    assert out.shape == (B, CLS_DIM)
    assert jnp.allclose(out, ref, atol=1e-3, rtol=1e-3), "mismatch vs JAX reference"

    print("KERNEL_OK")
</pallas_src>

<mosaic_0001>
module attributes {stable_mosaic.version = 11 : i64} {
  func.func @kernel(%arg0: i32, %arg1: memref<8x3x128xf32, #tpu.memory_space<vmem>>, %arg2: memref<128x3xf32, #tpu.memory_space<vmem>>, %arg3: memref<128x1xf32, #tpu.memory_space<vmem>>, %arg4: memref<128x8xf32, #tpu.memory_space<vmem>>, %arg5: memref<128x8xf32, #tpu.memory_space<vmem>>) attributes {dimension_semantics = [#tpu.dimension_semantics<arbitrary>], iteration_bounds = array<i64: 8>, scalar_prefetch = 0 : i64, scratch_operands = 1 : i64, tpu.core_type = #tpu.core_type<tc>, window_params = [{transform_indices = @transform_0, window_bounds = array<i64: 8, 3, 128>}, {pipeline_mode = #tpu.pipeline_mode<synchronous>, transform_indices = @transform_1, window_bounds = array<i64: 128, 3>}, {pipeline_mode = #tpu.pipeline_mode<synchronous>, transform_indices = @transform_2, window_bounds = array<i64: 128, 1>}, {pipeline_mode = #tpu.pipeline_mode<synchronous>, transform_indices = @transform_3, window_bounds = array<i64: 128, 8>}]} {
    %c0_i32 = arith.constant 0 : i32
    %0 = arith.cmpi eq, %arg0, %c0_i32 : i32
    %1 = arith.extui %0 : i1 to i32
    %c0_i32_0 = arith.constant 0 : i32
    %2 = arith.cmpi ne, %1, %c0_i32_0 : i32
    scf.if %2 {
      %cst_59 = arith.constant 0xFF800000 : f32
      %199 = vector.broadcast %cst_59 : f32 to vector<128x8xf32>
      %c0_60 = arith.constant 0 : index
      %c0_61 = arith.constant 0 : index
      %200 = vector.load %arg5[%c0_60, %c0_61] : memref<128x8xf32, #tpu.memory_space<vmem>>, vector<128x8xf32>
      tpu.vector_store %arg5[%c0_60, %c0_61], %199 {strides = array<i32>} : memref<128x8xf32, #tpu.memory_space<vmem>>, vector<128x8xf32>,
    } else {
    }
    %c0 = arith.constant 0 : index
    %c0_1 = arith.constant 0 : index
    %3 = vector.load %arg2[%c0, %c0_1] : memref<128x3xf32, #tpu.memory_space<vmem>>, vector<128x3xf32>
    %c0_2 = arith.constant 0 : index
    %c0_3 = arith.constant 0 : index
    %c0_4 = arith.constant 0 : index
    %4 = vector.load %arg1[%c0_2, %c0_3, %c0_4] : memref<8x3x128xf32, #tpu.memory_space<vmem>>, vector<1x3x128xf32>
    %5 = vector.shape_cast %4 : vector<1x3x128xf32> to vector<3x128xf32>
    %6 = vector.extract_strided_slice %3 {offsets = [0, 0], sizes = [128, 1], strides = [1, 1]} : vector<128x3xf32> to vector<128x1xf32>
    %7 = vector.extract_strided_slice %5 {offsets = [0, 0], sizes = [1, 128], strides = [1, 1]} : vector<3x128xf32> to vector<1x128xf32>
    %8 = vector.broadcast %6 : vector<128x1xf32> to vector<128x128xf32>
    %9 = vector.broadcast %7 : vector<1x128xf32> to vector<128x128xf32>
    %10 = arith.mulf %8, %9 : vector<128x128xf32>
    %11 = vector.extract_strided_slice %3 {offsets = [0, 1], sizes = [128, 1], strides = [1, 1]} : vector<128x3xf32> to vector<128x1xf32>
    %12 = vector.extract_strided_slice %5 {offsets = [1, 0], sizes = [1, 128], strides = [1, 1]} : vector<3x128xf32> to vector<1x128xf32>
    %13 = vector.broadcast %11 : vector<128x1xf32> to vector<128x128xf32>
    %14 = vector.broadcast %12 : vector<1x128xf32> to vector<128x128xf32>
    %15 = arith.mulf %13, %14 : vector<128x128xf32>
    %16 = arith.addf %10, %15 : vector<128x128xf32>
    %17 = vector.extract_strided_slice %3 {offsets = [0, 2], sizes = [128, 1], strides = [1, 1]} : vector<128x3xf32> to vector<128x1xf32>
    %18 = vector.extract_strided_slice %5 {offsets = [2, 0], sizes = [1, 128], strides = [1, 1]} : vector<3x128xf32> to vector<1x128xf32>
    %19 = vector.broadcast %17 : vector<128x1xf32> to vector<128x128xf32>
    %20 = vector.broadcast %18 : vector<1x128xf32> to vector<128x128xf32>
    %21 = arith.mulf %19, %20 : vector<128x128xf32>
    %22 = arith.addf %16, %21 : vector<128x128xf32>
    %cst = arith.constant dense<0xFF800000> : vector<128xf32>
    %23 = vector.multi_reduction <maximumf>, %22, %cst [1] : vector<128x128xf32> to vector<128xf32>
    %24 = vector.shape_cast %23 : vector<128xf32> to vector<128x1xf32>
    %c0_5 = arith.constant 0 : index
    %c0_6 = arith.constant 0 : index
    %25 = vector.load %arg5[%c0_5, %c0_6] : memref<128x8xf32, #tpu.memory_space<vmem>>, vector<128x1xf32>
    %26 = arith.maximumf %25, %24 : vector<128x1xf32>
    %c0_7 = arith.constant 0 : index
    %c0_8 = arith.constant 0 : index
    %27 = vector.load %arg5[%c0_7, %c0_8] : memref<128x8xf32, #tpu.memory_space<vmem>>, vector<128x1xf32>
    tpu.vector_store %arg5[%c0_7, %c0_8], %26 {strides = array<i32>} : memref<128x8xf32, #tpu.memory_space<vmem>>, vector<128x1xf32>,
    %c1 = arith.constant 1 : index
    %c0_9 = arith.constant 0 : index
    %c0_10 = arith.constant 0 : index
    %28 = vector.load %arg1[%c1, %c0_9, %c0_10] : memref<8x3x128xf32, #tpu.memory_space<vmem>>, vector<1x3x128xf32>
    %29 = vector.shape_cast %28 : vector<1x3x128xf32> to vector<3x128xf32>
    %30 = vector.extract_strided_slice %3 {offsets = [0, 0], sizes = [128, 1], strides = [1, 1]} : vector<128x3xf32> to vector<128x1xf32>
    %31 = vector.extract_strided_slice %29 {offsets = [0, 0], sizes = [1, 128], strides = [1, 1]} : vector<3x128xf32> to vector<1x128xf32>
    %32 = vector.broadcast %30 : vector<128x1xf32> to vector<128x128xf32>
    %33 = vector.broadcast %31 : vector<1x128xf32> to vector<128x128xf32>
    %34 = arith.mulf %32, %33 : vector<128x128xf32>
    %35 = vector.extract_strided_slice %3 {offsets = [0, 1], sizes = [128, 1], strides = [1, 1]} : vector<128x3xf32> to vector<128x1xf32>
    %36 = vector.extract_strided_slice %29 {offsets = [1, 0], sizes = [1, 128], strides = [1, 1]} : vector<3x128xf32> to vector<1x128xf32>
    %37 = vector.broadcast %35 : vector<128x1xf32> to vector<128x128xf32>
    %38 = vector.broadcast %36 : vector<1x128xf32> to vector<128x128xf32>
    %39 = arith.mulf %37, %38 : vector<128x128xf32>
    %40 = arith.addf %34, %39 : vector<128x128xf32>
    %41 = vector.extract_strided_slice %3 {offsets = [0, 2], sizes = [128, 1], strides = [1, 1]} : vector<128x3xf32> to vector<128x1xf32>
    %42 = vector.extract_strided_slice %29 {offsets = [2, 0], sizes = [1, 128], strides = [1, 1]} : vector<3x128xf32> to vector<1x128xf32>
    %43 = vector.broadcast %41 : vector<128x1xf32> to vector<128x128xf32>
    %44 = vector.broadcast %42 : vector<1x128xf32> to vector<128x128xf32>
    %45 = arith.mulf %43, %44 : vector<128x128xf32>
    %46 = arith.addf %40, %45 : vector<128x128xf32>
    %cst_11 = arith.constant dense<0xFF800000> : vector<128xf32>
    %47 = vector.multi_reduction <maximumf>, %46, %cst_11 [1] : vector<128x128xf32> to vector<128xf32>
    %48 = vector.shape_cast %47 : vector<128xf32> to vector<128x1xf32>
    %c0_12 = arith.constant 0 : index
    %c1_13 = arith.constant 1 : index
    %49 = vector.load %arg5[%c0_12, %c1_13] : memref<128x8xf32, #tpu.memory_space<vmem>>, vector<128x1xf32>
    %50 = arith.maximumf %49, %48 : vector<128x1xf32>
    %c0_14 = arith.constant 0 : index
    %c1_15 = arith.constant 1 : index
    %51 = vector.load %arg5[%c0_14, %c1_15] : memref<128x8xf32, #tpu.memory_space<vmem>>, vector<128x1xf32>
    tpu.vector_store %arg5[%c0_14, %c1_15], %50 {strides = array<i32>} : memref<128x8xf32, #tpu.memory_space<vmem>>, vector<128x1xf32>,
    %c2 = arith.constant 2 : index
    %c0_16 = arith.constant 0 : index
    %c0_17 = arith.constant 0 : index
    %52 = vector.load %arg1[%c2, %c0_16, %c0_17] : memref<8x3x128xf32, #tpu.memory_space<vmem>>, vector<1x3x128xf32>
    %53 = vector.shape_cast %52 : vector<1x3x128xf32> to vector<3x128xf32>
    %54 = vector.extract_strided_slice %3 {offsets = [0, 0], sizes = [128, 1], strides = [1, 1]} : vector<128x3xf32> to vector<128x1xf32>
    %55 = vector.extract_strided_slice %53 {offsets = [0, 0], sizes = [1, 128], strides = [1, 1]} : vector<3x128xf32> to vector<1x128xf32>
    %56 = vector.broadcast %54 : vector<128x1xf32> to vector<128x128xf32>
    %57 = vector.broadcast %55 : vector<1x128xf32> to vector<128x128xf32>
    %58 = arith.mulf %56, %57 : vector<128x128xf32>
    %59 = vector.extract_strided_slice %3 {offsets = [0, 1], sizes = [128, 1], strides = [1, 1]} : vector<128x3xf32> to vector<128x1xf32>
    %60 = vector.extract_strided_slice %53 {offsets = [1, 0], sizes = [1, 128], strides = [1, 1]} : vector<3x128xf32> to vector<1x128xf32>
    %61 = vector.broadcast %59 : vector<128x1xf32> to vector<128x128xf32>
    %62 = vector.broadcast %60 : vector<1x128xf32> to vector<128x128xf32>
    %63 = arith.mulf %61, %62 : vector<128x128xf32>
    %64 = arith.addf %58, %63 : vector<128x128xf32>
    %65 = vector.extract_strided_slice %3 {offsets = [0, 2], sizes = [128, 1], strides = [1, 1]} : vector<128x3xf32> to vector<128x1xf32>
    %66 = vector.extract_strided_slice %53 {offsets = [2, 0], sizes = [1, 128], strides = [1, 1]} : vector<3x128xf32> to vector<1x128xf32>
    %67 = vector.broadcast %65 : vector<128x1xf32> to vector<128x128xf32>
    %68 = vector.broadcast %66 : vector<1x128xf32> to vector<128x128xf32>
    %69 = arith.mulf %67, %68 : vector<128x128xf32>
    %70 = arith.addf %64, %69 : vector<128x128xf32>
    %cst_18 = arith.constant dense<0xFF800000> : vector<128xf32>
    %71 = vector.multi_reduction <maximumf>, %70, %cst_18 [1] : vector<128x128xf32> to vector<128xf32>
    %72 = vector.shape_cast %71 : vector<128xf32> to vector<128x1xf32>
    %c0_19 = arith.constant 0 : index
    %c2_20 = arith.constant 2 : index
    %73 = vector.load %arg5[%c0_19, %c2_20] : memref<128x8xf32, #tpu.memory_space<vmem>>, vector<128x1xf32>
    %74 = arith.maximumf %73, %72 : vector<128x1xf32>
    %c0_21 = arith.constant 0 : index
    %c2_22 = arith.constant 2 : index
    %75 = vector.load %arg5[%c0_21, %c2_22] : memref<128x8xf32, #tpu.memory_space<vmem>>, vector<128x1xf32>
    tpu.vector_store %arg5[%c0_21, %c2_22], %74 {strides = array<i32>} : memref<128x8xf32, #tpu.memory_space<vmem>>, vector<128x1xf32>,
    %c3 = arith.constant 3 : index
    %c0_23 = arith.constant 0 : index
    %c0_24 = arith.constant 0 : index
    %76 = vector.load %arg1[%c3, %c0_23, %c0_24] : memref<8x3x128xf32, #tpu.memory_space<vmem>>, vector<1x3x128xf32>
    %77 = vector.shape_cast %76 : vector<1x3x128xf32> to vector<3x128xf32>
    %78 = vector.extract_strided_slice %3 {offsets = [0, 0], sizes = [128, 1], strides = [1, 1]} : vector<128x3xf32> to vector<128x1xf32>
    %79 = vector.extract_strided_slice %77 {offsets = [0, 0], sizes = [1, 128], strides = [1, 1]} : vector<3x128xf32> to vector<1x128xf32>
    %80 = vector.broadcast %78 : vector<128x1xf32> to vector<128x128xf32>
    %81 = vector.broadcast %79 : vector<1x128xf32> to vector<128x128xf32>
    %82 = arith.mulf %80, %81 : vector<128x128xf32>
    %83 = vector.extract_strided_slice %3 {offsets = [0, 1], sizes = [128, 1], strides = [1, 1]} : vector<128x3xf32> to vector<128x1xf32>
    %84 = vector.extract_strided_slice %77 {offsets = [1, 0], sizes = [1, 128], strides = [1, 1]} : vector<3x128xf32> to vector<1x128xf32>
    %85 = vector.broadcast %83 : vector<128x1xf32> to vector<128x128xf32>
    %86 = vector.broadcast %84 : vector<1x128xf32> to vector<128x128xf32>
    %87 = arith.mulf %85, %86 : vector<128x128xf32>
    %88 = arith.addf %82, %87 : vector<128x128xf32>
    %89 = vector.extract_strided_slice %3 {offsets = [0, 2], sizes = [128, 1], strides = [1, 1]} : vector<128x3xf32> to vector<128x1xf32>
    %90 = vector.extract_strided_slice %77 {offsets = [2, 0], sizes = [1, 128], strides = [1, 1]} : vector<3x128xf32> to vector<1x128xf32>
    %91 = vector.broadcast %89 : vector<128x1xf32> to vector<128x128xf32>
    %92 = vector.broadcast %90 : vector<1x128xf32> to vector<128x128xf32>
    %93 = arith.mulf %91, %92 : vector<128x128xf32>
    %94 = arith.addf %88, %93 : vector<128x128xf32>
    %cst_25 = arith.constant dense<0xFF800000> : vector<128xf32>
    %95 = vector.multi_reduction <maximumf>, %94, %cst_25 [1] : vector<128x128xf32> to vector<128xf32>
    %96 = vector.shape_cast %95 : vector<128xf32> to vector<128x1xf32>
    %c0_26 = arith.constant 0 : index
    %c3_27 = arith.constant 3 : index
    %97 = vector.load %arg5[%c0_26, %c3_27] : memref<128x8xf32, #tpu.memory_space<vmem>>, vector<128x1xf32>
    %98 = arith.maximumf %97, %96 : vector<128x1xf32>
    %c0_28 = arith.constant 0 : index
    %c3_29 = arith.constant 3 : index
    %99 = vector.load %arg5[%c0_28, %c3_29] : memref<128x8xf32, #tpu.memory_space<vmem>>, vector<128x1xf32>
    tpu.vector_store %arg5[%c0_28, %c3_29], %98 {strides = array<i32>} : memref<128x8xf32, #tpu.memory_space<vmem>>, vector<128x1xf32>,
    %c4 = arith.constant 4 : index
    %c0_30 = arith.constant 0 : index
    %c0_31 = arith.constant 0 : index
    %100 = vector.load %arg1[%c4, %c0_30, %c0_31] : memref<8x3x128xf32, #tpu.memory_space<vmem>>, vector<1x3x128xf32>
    %101 = vector.shape_cast %100 : vector<1x3x128xf32> to vector<3x128xf32>
    %102 = vector.extract_strided_slice %3 {offsets = [0, 0], sizes = [128, 1], strides = [1, 1]} : vector<128x3xf32> to vector<128x1xf32>
    %103 = vector.extract_strided_slice %101 {offsets = [0, 0], sizes = [1, 128], strides = [1, 1]} : vector<3x128xf32> to vector<1x128xf32>
    %104 = vector.broadcast %102 : vector<128x1xf32> to vector<128x128xf32>
    %105 = vector.broadcast %103 : vector<1x128xf32> to vector<128x128xf32>
    %106 = arith.mulf %104, %105 : vector<128x128xf32>
    %107 = vector.extract_strided_slice %3 {offsets = [0, 1], sizes = [128, 1], strides = [1, 1]} : vector<128x3xf32> to vector<128x1xf32>
    %108 = vector.extract_strided_slice %101 {offsets = [1, 0], sizes = [1, 128], strides = [1, 1]} : vector<3x128xf32> to vector<1x128xf32>
    %109 = vector.broadcast %107 : vector<128x1xf32> to vector<128x128xf32>
    %110 = vector.broadcast %108 : vector<1x128xf32> to vector<128x128xf32>
    %111 = arith.mulf %109, %110 : vector<128x128xf32>
    %112 = arith.addf %106, %111 : vector<128x128xf32>
    %113 = vector.extract_strided_slice %3 {offsets = [0, 2], sizes = [128, 1], strides = [1, 1]} : vector<128x3xf32> to vector<128x1xf32>
    %114 = vector.extract_strided_slice %101 {offsets = [2, 0], sizes = [1, 128], strides = [1, 1]} : vector<3x128xf32> to vector<1x128xf32>
    %115 = vector.broadcast %113 : vector<128x1xf32> to vector<128x128xf32>
    %116 = vector.broadcast %114 : vector<1x128xf32> to vector<128x128xf32>
    %117 = arith.mulf %115, %116 : vector<128x128xf32>
    %118 = arith.addf %112, %117 : vector<128x128xf32>
    %cst_32 = arith.constant dense<0xFF800000> : vector<128xf32>
    %119 = vector.multi_reduction <maximumf>, %118, %cst_32 [1] : vector<128x128xf32> to vector<128xf32>
    %120 = vector.shape_cast %119 : vector<128xf32> to vector<128x1xf32>
    %c0_33 = arith.constant 0 : index
    %c4_34 = arith.constant 4 : index
    %121 = vector.load %arg5[%c0_33, %c4_34] : memref<128x8xf32, #tpu.memory_space<vmem>>, vector<128x1xf32>
    %122 = arith.maximumf %121, %120 : vector<128x1xf32>
    %c0_35 = arith.constant 0 : index
    %c4_36 = arith.constant 4 : index
    %123 = vector.load %arg5[%c0_35, %c4_36] : memref<128x8xf32, #tpu.memory_space<vmem>>, vector<128x1xf32>
    tpu.vector_store %arg5[%c0_35, %c4_36], %122 {strides = array<i32>} : memref<128x8xf32, #tpu.memory_space<vmem>>, vector<128x1xf32>,
    %c5 = arith.constant 5 : index
    %c0_37 = arith.constant 0 : index
    %c0_38 = arith.constant 0 : index
    %124 = vector.load %arg1[%c5, %c0_37, %c0_38] : memref<8x3x128xf32, #tpu.memory_space<vmem>>, vector<1x3x128xf32>
    %125 = vector.shape_cast %124 : vector<1x3x128xf32> to vector<3x128xf32>
    %126 = vector.extract_strided_slice %3 {offsets = [0, 0], sizes = [128, 1], strides = [1, 1]} : vector<128x3xf32> to vector<128x1xf32>
    %127 = vector.extract_strided_slice %125 {offsets = [0, 0], sizes = [1, 128], strides = [1, 1]} : vector<3x128xf32> to vector<1x128xf32>
    %128 = vector.broadcast %126 : vector<128x1xf32> to vector<128x128xf32>
    %129 = vector.broadcast %127 : vector<1x128xf32> to vector<128x128xf32>
    %130 = arith.mulf %128, %129 : vector<128x128xf32>
    %131 = vector.extract_strided_slice %3 {offsets = [0, 1], sizes = [128, 1], strides = [1, 1]} : vector<128x3xf32> to vector<128x1xf32>
    %132 = vector.extract_strided_slice %125 {offsets = [1, 0], sizes = [1, 128], strides = [1, 1]} : vector<3x128xf32> to vector<1x128xf32>
    %133 = vector.broadcast %131 : vector<128x1xf32> to vector<128x128xf32>
    %134 = vector.broadcast %132 : vector<1x128xf32> to vector<128x128xf32>
    %135 = arith.mulf %133, %134 : vector<128x128xf32>
    %136 = arith.addf %130, %135 : vector<128x128xf32>
    %137 = vector.extract_strided_slice %3 {offsets = [0, 2], sizes = [128, 1], strides = [1, 1]} : vector<128x3xf32> to vector<128x1xf32>
    %138 = vector.extract_strided_slice %125 {offsets = [2, 0], sizes = [1, 128], strides = [1, 1]} : vector<3x128xf32> to vector<1x128xf32>
    %139 = vector.broadcast %137 : vector<128x1xf32> to vector<128x128xf32>
    %140 = vector.broadcast %138 : vector<1x128xf32> to vector<128x128xf32>
    %141 = arith.mulf %139, %140 : vector<128x128xf32>
    %142 = arith.addf %136, %141 : vector<128x128xf32>
    %cst_39 = arith.constant dense<0xFF800000> : vector<128xf32>
    %143 = vector.multi_reduction <maximumf>, %142, %cst_39 [1] : vector<128x128xf32> to vector<128xf32>
    %144 = vector.shape_cast %143 : vector<128xf32> to vector<128x1xf32>
    %c0_40 = arith.constant 0 : index
    %c5_41 = arith.constant 5 : index
    %145 = vector.load %arg5[%c0_40, %c5_41] : memref<128x8xf32, #tpu.memory_space<vmem>>, vector<128x1xf32>
    %146 = arith.maximumf %145, %144 : vector<128x1xf32>
    %c0_42 = arith.constant 0 : index
    %c5_43 = arith.constant 5 : index
    %147 = vector.load %arg5[%c0_42, %c5_43] : memref<128x8xf32, #tpu.memory_space<vmem>>, vector<128x1xf32>
    tpu.vector_store %arg5[%c0_42, %c5_43], %146 {strides = array<i32>} : memref<128x8xf32, #tpu.memory_space<vmem>>, vector<128x1xf32>,
    %c6 = arith.constant 6 : index
    %c0_44 = arith.constant 0 : index
    %c0_45 = arith.constant 0 : index
    %148 = vector.load %arg1[%c6, %c0_44, %c0_45] : memref<8x3x128xf32, #tpu.memory_space<vmem>>, vector<1x3x128xf32>
    %149 = vector.shape_cast %148 : vector<1x3x128xf32> to vector<3x128xf32>
    %150 = vector.extract_strided_slice %3 {offsets = [0, 0], sizes = [128, 1], strides = [1, 1]} : vector<128x3xf32> to vector<128x1xf32>
    %151 = vector.extract_strided_slice %149 {offsets = [0, 0], sizes = [1, 128], strides = [1, 1]} : vector<3x128xf32> to vector<1x128xf32>
    %152 = vector.broadcast %150 : vector<128x1xf32> to vector<128x128xf32>
    %153 = vector.broadcast %151 : vector<1x128xf32> to vector<128x128xf32>
    %154 = arith.mulf %152, %153 : vector<128x128xf32>
    %155 = vector.extract_strided_slice %3 {offsets = [0, 1], sizes = [128, 1], strides = [1, 1]} : vector<128x3xf32> to vector<128x1xf32>
    %156 = vector.extract_strided_slice %149 {offsets = [1, 0], sizes = [1, 128], strides = [1, 1]} : vector<3x128xf32> to vector<1x128xf32>
    %157 = vector.broadcast %155 : vector<128x1xf32> to vector<128x128xf32>
    %158 = vector.broadcast %156 : vector<1x128xf32> to vector<128x128xf32>
    %159 = arith.mulf %157, %158 : vector<128x128xf32>
    %160 = arith.addf %154, %159 : vector<128x128xf32>
    %161 = vector.extract_strided_slice %3 {offsets = [0, 2], sizes = [128, 1], strides = [1, 1]} : vector<128x3xf32> to vector<128x1xf32>
    %162 = vector.extract_strided_slice %149 {offsets = [2, 0], sizes = [1, 128], strides = [1, 1]} : vector<3x128xf32> to vector<1x128xf32>
    %163 = vector.broadcast %161 : vector<128x1xf32> to vector<128x128xf32>
    %164 = vector.broadcast %162 : vector<1x128xf32> to vector<128x128xf32>
    %165 = arith.mulf %163, %164 : vector<128x128xf32>
    %166 = arith.addf %160, %165 : vector<128x128xf32>
    %cst_46 = arith.constant dense<0xFF800000> : vector<128xf32>
    %167 = vector.multi_reduction <maximumf>, %166, %cst_46 [1] : vector<128x128xf32> to vector<128xf32>
    %168 = vector.shape_cast %167 : vector<128xf32> to vector<128x1xf32>
    %c0_47 = arith.constant 0 : index
    %c6_48 = arith.constant 6 : index
    %169 = vector.load %arg5[%c0_47, %c6_48] : memref<128x8xf32, #tpu.memory_space<vmem>>, vector<128x1xf32>
    %170 = arith.maximumf %169, %168 : vector<128x1xf32>
    %c0_49 = arith.constant 0 : index
    %c6_50 = arith.constant 6 : index
    %171 = vector.load %arg5[%c0_49, %c6_50] : memref<128x8xf32, #tpu.memory_space<vmem>>, vector<128x1xf32>
    tpu.vector_store %arg5[%c0_49, %c6_50], %170 {strides = array<i32>} : memref<128x8xf32, #tpu.memory_space<vmem>>, vector<128x1xf32>,
    %c7 = arith.constant 7 : index
    %c0_51 = arith.constant 0 : index
    %c0_52 = arith.constant 0 : index
    %172 = vector.load %arg1[%c7, %c0_51, %c0_52] : memref<8x3x128xf32, #tpu.memory_space<vmem>>, vector<1x3x128xf32>
    %173 = vector.shape_cast %172 : vector<1x3x128xf32> to vector<3x128xf32>
    %174 = vector.extract_strided_slice %3 {offsets = [0, 0], sizes = [128, 1], strides = [1, 1]} : vector<128x3xf32> to vector<128x1xf32>
    %175 = vector.extract_strided_slice %173 {offsets = [0, 0], sizes = [1, 128], strides = [1, 1]} : vector<3x128xf32> to vector<1x128xf32>
    %176 = vector.broadcast %174 : vector<128x1xf32> to vector<128x128xf32>
    %177 = vector.broadcast %175 : vector<1x128xf32> to vector<128x128xf32>
    %178 = arith.mulf %176, %177 : vector<128x128xf32>
    %179 = vector.extract_strided_slice %3 {offsets = [0, 1], sizes = [128, 1], strides = [1, 1]} : vector<128x3xf32> to vector<128x1xf32>
    %180 = vector.extract_strided_slice %173 {offsets = [1, 0], sizes = [1, 128], strides = [1, 1]} : vector<3x128xf32> to vector<1x128xf32>
    %181 = vector.broadcast %179 : vector<128x1xf32> to vector<128x128xf32>
    %182 = vector.broadcast %180 : vector<1x128xf32> to vector<128x128xf32>
    %183 = arith.mulf %181, %182 : vector<128x128xf32>
    %184 = arith.addf %178, %183 : vector<128x128xf32>
    %185 = vector.extract_strided_slice %3 {offsets = [0, 2], sizes = [128, 1], strides = [1, 1]} : vector<128x3xf32> to vector<128x1xf32>
    %186 = vector.extract_strided_slice %173 {offsets = [2, 0], sizes = [1, 128], strides = [1, 1]} : vector<3x128xf32> to vector<1x128xf32>
    %187 = vector.broadcast %185 : vector<128x1xf32> to vector<128x128xf32>
    %188 = vector.broadcast %186 : vector<1x128xf32> to vector<128x128xf32>
    %189 = arith.mulf %187, %188 : vector<128x128xf32>
    %190 = arith.addf %184, %189 : vector<128x128xf32>
    %cst_53 = arith.constant dense<0xFF800000> : vector<128xf32>
    %191 = vector.multi_reduction <maximumf>, %190, %cst_53 [1] : vector<128x128xf32> to vector<128xf32>
    %192 = vector.shape_cast %191 : vector<128xf32> to vector<128x1xf32>
    %c0_54 = arith.constant 0 : index
    %c7_55 = arith.constant 7 : index
    %193 = vector.load %arg5[%c0_54, %c7_55] : memref<128x8xf32, #tpu.memory_space<vmem>>, vector<128x1xf32>
    %194 = arith.maximumf %193, %192 : vector<128x1xf32>
    %c0_56 = arith.constant 0 : index
    %c7_57 = arith.constant 7 : index
    %195 = vector.load %arg5[%c0_56, %c7_57] : memref<128x8xf32, #tpu.memory_space<vmem>>, vector<128x1xf32>
    tpu.vector_store %arg5[%c0_56, %c7_57], %194 {strides = array<i32>} : memref<128x8xf32, #tpu.memory_space<vmem>>, vector<128x1xf32>,
    %c7_i32 = arith.constant 7 : i32
    %196 = arith.cmpi eq, %arg0, %c7_i32 : i32
    %197 = arith.extui %196 : i1 to i32
    %c0_i32_58 = arith.constant 0 : i32
    %198 = arith.cmpi ne, %197, %c0_i32_58 : i32
    scf.if %198 {
      %c0_59 = arith.constant 0 : index
      %c0_60 = arith.constant 0 : index
      %199 = vector.load %arg5[%c0_59, %c0_60] : memref<128x8xf32, #tpu.memory_space<vmem>>, vector<128x8xf32>
      %c0_61 = arith.constant 0 : index
      %c0_62 = arith.constant 0 : index
      %200 = vector.load %arg3[%c0_61, %c0_62] : memref<128x1xf32, #tpu.memory_space<vmem>>, vector<128x1xf32>
      %201 = vector.broadcast %200 : vector<128x1xf32> to vector<128x8xf32>
      %202 = arith.addf %199, %201 : vector<128x8xf32>
      %cst_63 = arith.constant 0.000000e+00 : f32
      %203 = vector.broadcast %cst_63 : f32 to vector<128x8xf32>
      %204 = arith.maximumf %202, %203 : vector<128x8xf32>
      %c0_64 = arith.constant 0 : index
      %c0_65 = arith.constant 0 : index
      %205 = vector.load %arg4[%c0_64, %c0_65] : memref<128x8xf32, #tpu.memory_space<vmem>>, vector<128x8xf32>
      tpu.vector_store %arg4[%c0_64, %c0_65], %204 {strides = array<i32>} : memref<128x8xf32, #tpu.memory_space<vmem>>, vector<128x8xf32>,
    } else {
    }
    return
  }
  func.func @transform_0(%arg0: i32) -> (i32, i32, i32) {
    %c0_i32 = arith.constant 0 : i32
    %c0_i32_0 = arith.constant 0 : i32
    %c0_i32_1 = arith.constant 0 : i32
    return %c0_i32, %c0_i32_0, %arg0 : i32, i32, i32
  }
  func.func @transform_1(%arg0: i32) -> (i32, i32) {
    %c0_i32 = arith.constant 0 : i32
    %c0_i32_0 = arith.constant 0 : i32
    %c0_i32_1 = arith.constant 0 : i32
    return %c0_i32, %c0_i32_0 : i32, i32
  }
  func.func @transform_2(%arg0: i32) -> (i32, i32) {
    %c0_i32 = arith.constant 0 : i32
    %c0_i32_0 = arith.constant 0 : i32
    %c0_i32_1 = arith.constant 0 : i32
    return %c0_i32, %c0_i32_0 : i32, i32
  }
  func.func @transform_3(%arg0: i32) -> (i32, i32) {
    %c0_i32 = arith.constant 0 : i32
    %c0_i32_0 = arith.constant 0 : i32
    %c0_i32_1 = arith.constant 0 : i32
    return %c0_i32, %c0_i32_0 : i32, i32
  }
}

</mosaic_0001>

<llo_original>
// kernel: tpu_custom_call.1
$region0: #{tpu_custom_call.1}
  #allocation0 [shape = 'u32[]', space=smem, size = 0x4, offset = 0x4, fixed_abs, tag = 'smem constant byte address 0x4 - core index']
  #allocation1 [shape = 'u32[144,128]{1,0:T(1,128)}', space=vmem, size = 0x12000, scoped, tag = 'internal scratch']
  #allocation2 [shape = 'f32[128,8]{1,0:T(8,128)}', space=vmem, size = 0x10000, scoped, tag = 'scratch operand']
  %s0 = inlined_call_operand.vmem [shape: f32[8,3,1024], index: 0, kind: input, shape index: {}]
  %s1 = inlined_call_operand.vmem [shape: f32[128,3], index: 1, kind: input, shape index: {}]
  %s2 = inlined_call_operand.vmem [shape: f32[128,1], index: 2, kind: input, shape index: {}]
  %s3 = inlined_call_operand.vmem [shape: f32[128,8], index: 3, kind: output, shape index: {}]
  %s4 = sld [smem:[#allocation0]]
  $region94: #{tpu_custom_call.1} parent=0
    _
  %s6 = ssub.s32 1, %s4
  %s7 = scalar_select 0, %s6, %s4
  $region1: #{tpu_custom_call.1} parent=0
    #allocation3 [shape = 'u8[32768]{0}', space=vmem, size = 0x8000, scoped, tag = 'input window, operand 0']
    loop: start=0, step=1, limit=10
    $region2: #{tpu_custom_call.1} parent=1 // loop_pre_header
      _
    $region3: #{tpu_custom_call.1} parent=1 // loop_header
      %s9 = sphi 0, %s13
      %p10 = scmp.ge.s32.totalorder %s9, 10
      %s19 = sphi 0, %s21
      %s22 = sphi 0, %s19
      %s23 = sphi 0, %s22
      %s39 = sphi 0, %s23
      %s43 = sphi 0, %s43
      %s45 = sphi 0, %s43
      %s46 = sphi 0, %s45
      %s60 = sphi 0, %s46
      %s64 = sphi 0, %s64
      %s66 = sphi 0, %s64
      %s67 = sphi 0, %s66
      %s81 = sphi 0, %s67
      %s85 = sphi 0, %s85
      %s87 = sphi 0, %s85
      %s88 = sphi 0, %s87
      %s102 = sphi 0, %s88
    $region4: #{tpu_custom_call.1} parent=1 // loop_header_branch
      %12 = sbr.rel (%p10) target = $region8
    $region5: #{tpu_custom_call.1} parent=1 // loop_body
      %s14 = ssub.s32 %s9, 1
      %s15 = ssub.s32 %s9, 2
      %s16 = sadd.s32 %s9, 1
      %s17 = ssub.s32 %s9, %s16
      %p18 = scmp.eq.s32.totalorder %s17, 0
      %s20 = sadd.s32 %s19, 1
      %s21 = scalar_select %p18, %s19, %s20
      %p24 = pneg %p18
      %p25 = scmp.eq.s32.totalorder %s9, 7
      %p26 = por %p24, %p25
      %p27 = scmp.ne.s32.totalorder %s19, %s22
      %p28 = scmp.eq.s32.totalorder %s9, 0
      %p29 = por %p27, %p28
      %p30 = scmp.ne.s32.totalorder %s19, %s22
      %p31 = scmp.eq.s32.totalorder %s14, 7
      %p32 = por %p30, %p31
      %p33 = scmp.ne.s32.totalorder %s22, %s23
      %p34 = scmp.eq.s32.totalorder %s14, 0
      %p35 = por %p33, %p34
      %p36 = scmp.ne.s32.totalorder %s22, %s23
      %p37 = scmp.eq.s32.totalorder %s15, 7
      %p38 = por %p36, %p37
      %p40 = scmp.ne.s32.totalorder %s23, %s39
      %p41 = scmp.eq.s32.totalorder %s15, 0
      %p42 = por %p40, %p41
      %s44 = sadd.s32 %s43, 1
      %p47 = scmp.eq.s32.totalorder %s9, 7
      %p48 = scmp.ne.s32.totalorder %s43, %s45
      %p49 = scmp.eq.s32.totalorder %s9, 0
      %p50 = por %p48, %p49
      %p51 = scmp.ne.s32.totalorder %s43, %s45
      %p52 = scmp.eq.s32.totalorder %s14, 7
      %p53 = por %p51, %p52
      %p54 = scmp.ne.s32.totalorder %s45, %s46
      %p55 = scmp.eq.s32.totalorder %s14, 0
      %p56 = por %p54, %p55
      %p57 = scmp.ne.s32.totalorder %s45, %s46
      %p58 = scmp.eq.s32.totalorder %s15, 7
      %p59 = por %p57, %p58
      %p61 = scmp.ne.s32.totalorder %s46, %s60
      %p62 = scmp.eq.s32.totalorder %s15, 0
      %p63 = por %p61, %p62
      %s65 = sadd.s32 %s64, 1
      %p68 = scmp.eq.s32.totalorder %s9, 7
      %p69 = scmp.ne.s32.totalorder %s64, %s66
      %p70 = scmp.eq.s32.totalorder %s9, 0
      %p71 = por %p69, %p70
      %p72 = scmp.ne.s32.totalorder %s64, %s66
      %p73 = scmp.eq.s32.totalorder %s14, 7
      %p74 = por %p72, %p73
      %p75 = scmp.ne.s32.totalorder %s66, %s67
      %p76 = scmp.eq.s32.totalorder %s14, 0
      %p77 = por %p75, %p76
      %p78 = scmp.ne.s32.totalorder %s66, %s67
      %p79 = scmp.eq.s32.totalorder %s15, 7
      %p80 = por %p78, %p79
      %p82 = scmp.ne.s32.totalorder %s67, %s81
      %p83 = scmp.eq.s32.totalorder %s15, 0
      %p84 = por %p82, %p83
      %s86 = sadd.s32 %s85, 1
      %p89 = scmp.eq.s32.totalorder %s9, 7
      %p90 = scmp.ne.s32.totalorder %s85, %s87
      %p91 = scmp.eq.s32.totalorder %s9, 0
      %p92 = por %p90, %p91
      %p93 = scmp.ne.s32.totalorder %s85, %s87
      %p94 = scmp.eq.s32.totalorder %s14, 7
      %p95 = por %p93, %p94
      %p96 = scmp.ne.s32.totalorder %s87, %s88
      %p97 = scmp.eq.s32.totalorder %s14, 0
      %p98 = por %p96, %p97
      %p99 = scmp.ne.s32.totalorder %s87, %s88
      %p100 = scmp.eq.s32.totalorder %s15, 7
      %p101 = por %p99, %p100
      %p103 = scmp.ne.s32.totalorder %s88, %s102
      %p104 = scmp.eq.s32.totalorder %s15, 0
      %p105 = por %p103, %p104
      %p106 = scmp.le.s32.totalorder 1, %s9
      %p107 = scmp.lt.s32.totalorder %s9, 9
      %p108 = pnand %p106, %p107
      %p109 = pneg %p108
      // Predicated region
      $region9: #{tpu_custom_call.1} parent=5 // pred_check
        _
      $region10: #{tpu_custom_call.1} parent=5 // pred_check_branch
        %111 = sbr.rel (%p108) target = $region12
      $region11: #{tpu_custom_call.1} parent=5 // pred_region
        %s112 = ssub.s32 %s9, 1
        // Predicated region
        $region13: #{tpu_custom_call.1} parent=11 // pred_check
          %p113 = pneg %p56
        $region14: #{tpu_custom_call.1} parent=11 // pred_check_branch
          %115 = sbr.rel (%p113) target = $region16
        $region15: #{tpu_custom_call.1} parent=11 // pred_region
          _
        $region16: #{tpu_custom_call.1} parent=11 // pred_fallthru
          _
        // Predicated region
        $region17: #{tpu_custom_call.1} parent=11 // pred_check
          %p116 = pneg %p77
        $region18: #{tpu_custom_call.1} parent=11 // pred_check_branch
          %118 = sbr.rel (%p116) target = $region20
        $region19: #{tpu_custom_call.1} parent=11 // pred_region
          _
        $region20: #{tpu_custom_call.1} parent=11 // pred_fallthru
          _
      $region12: #{tpu_custom_call.1} parent=5 // pred_fallthru
        _
      %p119 = scmp.lt.s32.totalorder %s9, 8
      // Predicated region
      $region21: #{tpu_custom_call.1} parent=5 // pred_check
        %p120 = pneg %p119
      $region22: #{tpu_custom_call.1} parent=5 // pred_check_branch
        %122 = sbr.rel (%p120) target = $region24
      $region23: #{tpu_custom_call.1} parent=5 // pred_region
        // Predicated region
        $region25: #{tpu_custom_call.1} parent=23 // pred_check
          %p123 = pneg %p29
        $region26: #{tpu_custom_call.1} parent=23 // pred_check_branch
          %125 = sbr.rel (%p123) target = $region28
        $region27: #{tpu_custom_call.1} parent=23 // pred_region
          %s126 = sand.u32 %s19, 1
          %s127 = sand.u32 %s19, 1
          %s128 = smul.addr %s127, 32
          %s129 = scalar_lea.vmem [#allocation3], %s128
          %s130 = smul.addr %s9, 4
          %s131 = scalar_lea.vmem %s0, %s130
          // Predicated region
          $region29: #{tpu_custom_call.1} parent=27 // pred_check
            _
          $region30: #{tpu_custom_call.1} parent=27 // pred_check_branch
            %133 = sbr.rel (0) target = $region32
          $region31: #{tpu_custom_call.1} parent=27 // pred_region
            // Predicated region
            $region33: #{tpu_custom_call.1} parent=31 // pred_check
              _
            $region34: #{tpu_custom_call.1} parent=31 // pred_check_branch
              %135 = sbr.rel target = $region36
            $region35: #{tpu_custom_call.1} parent=31 // pred_region
              // Predicated region
              $region48: #{tpu_custom_call.1} parent=35 // pred_check
                _
              $region49: #{tpu_custom_call.1} parent=35 // pred_check_branch
                %165 = sbr.rel (0) target = $region51
              $region50: #{tpu_custom_call.1} parent=35 // pred_region
                loop: start=0, step=1, limit=1
                $region52: #{tpu_custom_call.1} parent=50 // loop_pre_header
                  _
                $region53: #{tpu_custom_call.1} parent=50 // loop_header
                  %s167 = sphi 0, %s171
                  %p168 = scmp.ge.s32.totalorder %s167, 1
                  %s172 = sphi %s131, %s131
                  %s173 = sphi %s129, %s129
                $region54: #{tpu_custom_call.1} parent=50 // loop_header_branch
                  %170 = sbr.rel (%p168) target = $region58
                $region55: #{tpu_custom_call.1} parent=50 // loop_body
                  _
                $region56: #{tpu_custom_call.1} parent=50 // loop_footer
                  %s171 = sadd.s32 1, %s167
                $region57: #{tpu_custom_call.1} parent=50 // loop_footer_branch
                  %166 = sbr.rel target = $region53
                $region58: #{tpu_custom_call.1} parent=50 // loop_exit
                  _
                %s175 = ssub.s32 16, 1
                loop: start=0, step=1, limit=1
                $region59: #{tpu_custom_call.1} parent=50 // loop_pre_header
                  _
                $region60: #{tpu_custom_call.1} parent=50 // loop_header
                  %s177 = sphi 0, %s181
                  %p178 = scmp.ge.s32.totalorder %s177, 1
                  %s182 = sphi %s131, %s131
                  %s183 = sphi %s129, %s129
                $region61: #{tpu_custom_call.1} parent=50 // loop_header_branch
                  %180 = sbr.rel (%p178) target = $region65
                $region62: #{tpu_custom_call.1} parent=50 // loop_body
                  %v184 = vld [vmem:[%s182] sm:%s175]
                  %185 = vst [vmem:[%s183] sm:%s175] %v184
                  %v186 = vld [vmem:[%s182 + $0x20] sm:%s175]
                  %187 = vst [vmem:[%s183 + $0x4] sm:%s175] %v186
                  %v188 = vld [vmem:[%s182 + $0x40] sm:%s175]
                  %189 = vst [vmem:[%s183 + $0x8] sm:%s175] %v188
                  %v190 = vld [vmem:[%s182 + $0x60] sm:%s175]
                  %191 = vst [vmem:[%s183 + $0xc] sm:%s175] %v190
                  %v192 = vld [vmem:[%s182 + $0x80] sm:%s175]
                  %193 = vst [vmem:[%s183 + $0x10] sm:%s175] %v192
                  %v194 = vld [vmem:[%s182 + $0xa0] sm:%s175]
                  %195 = vst [vmem:[%s183 + $0x14] sm:%s175] %v194
                  %v196 = vld [vmem:[%s182 + $0xc0] sm:%s175]
                  %197 = vst [vmem:[%s183 + $0x18] sm:%s175] %v196
                  %v198 = vld [vmem:[%s182 + $0xe0] sm:%s175]
                  %199 = vst [vmem:[%s183 + $0x1c] sm:%s175] %v198
                $region63: #{tpu_custom_call.1} parent=50 // loop_footer
                  %s181 = sadd.s32 1, %s177
                $region64: #{tpu_custom_call.1} parent=50 // loop_footer_branch
                  %176 = sbr.rel target = $region60
                $region65: #{tpu_custom_call.1} parent=50 // loop_exit
                  _
              $region51: #{tpu_custom_call.1} parent=35 // pred_fallthru
                _
            $region36: #{tpu_custom_call.1} parent=31 // pred_fallthru
              _
            // Predicated region
            $region37: #{tpu_custom_call.1} parent=31 // pred_check
              _
            $region38: #{tpu_custom_call.1} parent=31 // pred_check_branch
              %137 = sbr.rel (0) target = $region40
            $region39: #{tpu_custom_call.1} parent=31 // pred_region
              %s139 = ssub.s32 16, 1
              loop: start=0, step=1, limit=1
              $region41: #{tpu_custom_call.1} parent=39 // loop_pre_header
                _
              $region42: #{tpu_custom_call.1} parent=39 // loop_header
                %s141 = sphi 0, %s145
                %p142 = scmp.ge.s32.totalorder %s141, 1
                %s146 = sphi %s131, %s131
                %s147 = sphi %s129, %s129
              $region43: #{tpu_custom_call.1} parent=39 // loop_header_branch
                %144 = sbr.rel (%p142) target = $region47
              $region44: #{tpu_custom_call.1} parent=39 // loop_body
                %v148 = vld [vmem:[%s146] sm:%s139]
                %149 = vst [vmem:[%s147] sm:%s139] %v148
                %v150 = vld [vmem:[%s146 + $0x20] sm:%s139]
                %151 = vst [vmem:[%s147 + $0x4] sm:%s139] %v150
                %v152 = vld [vmem:[%s146 + $0x40] sm:%s139]
                %153 = vst [vmem:[%s147 + $0x8] sm:%s139] %v152
                %v154 = vld [vmem:[%s146 + $0x60] sm:%s139]
                %155 = vst [vmem:[%s147 + $0xc] sm:%s139] %v154
                %v156 = vld [vmem:[%s146 + $0x80] sm:%s139]
                %157 = vst [vmem:[%s147 + $0x10] sm:%s139] %v156
                %v158 = vld [vmem:[%s146 + $0xa0] sm:%s139]
                %159 = vst [vmem:[%s147 + $0x14] sm:%s139] %v158
                %v160 = vld [vmem:[%s146 + $0xc0] sm:%s139]
                %161 = vst [vmem:[%s147 + $0x18] sm:%s139] %v160
                %v162 = vld [vmem:[%s146 + $0xe0] sm:%s139]
                %163 = vst [vmem:[%s147 + $0x1c] sm:%s139] %v162
              $region45: #{tpu_custom_call.1} parent=39 // loop_footer
                %s145 = sadd.s32 1, %s141
              $region46: #{tpu_custom_call.1} parent=39 // loop_footer_branch
                %140 = sbr.rel target = $region42
              $region47: #{tpu_custom_call.1} parent=39 // loop_exit
                _
            $region40: #{tpu_custom_call.1} parent=31 // pred_fallthru
              _
          $region32: #{tpu_custom_call.1} parent=27 // pred_fallthru
            _
          %200 = vnop
        $region28: #{tpu_custom_call.1} parent=23 // pred_fallthru
          _
      $region24: #{tpu_custom_call.1} parent=5 // pred_fallthru
        _
      %p201 = scmp.le.s32.totalorder 1, %s9
      %p202 = scmp.lt.s32.totalorder %s9, 9
      %p203 = pnand %p201, %p202
      %p204 = pneg %p203
      // Predicated region
      $region66: #{tpu_custom_call.1} parent=5 // pred_check
        _
      $region67: #{tpu_custom_call.1} parent=5 // pred_check_branch
        %206 = sbr.rel (%p203) target = $region69
      $region68: #{tpu_custom_call.1} parent=5 // pred_region
        %s207 = ssub.s32 %s9, 1
        %s208 = sand.u32 %s22, 1
        %s209 = sand.u32 %s22, 1
        %s210 = smul.addr %s209, 32
        %s211 = scalar_lea.vmem [#allocation3], %s210
        // Predicated region
        $region70: #{tpu_custom_call.1} parent=68 // pred_check
          %p212 = pneg %p35
        $region71: #{tpu_custom_call.1} parent=68 // pred_check_branch
          %214 = sbr.rel (%p212) target = $region73
        $region72: #{tpu_custom_call.1} parent=68 // pred_region
          _
        $region73: #{tpu_custom_call.1} parent=68 // pred_fallthru
          _
        %s215 = sand.u32 %s22, 1
        %s216 = sand.u32 %s22, 1
        %s217 = smul.addr %s216, 32
        %s218 = scalar_lea.vmem [#allocation3], %s217
        %p219 = pneg %p35
        %p220 = pneg %p32
        %p221 = pneg %p56
        %p222 = pneg %p53
        %p223 = pneg %p77
        %p224 = pneg %p74
        %p225 = pneg %p98
        %p226 = pneg %p95
        %p227 = scmp.eq.s32.totalorder %s14, 0
        // Predicated region
        $region74: #{tpu_custom_call.1} parent=68 // pred_check
          %p228 = pneg %p227
        $region75: #{tpu_custom_call.1} parent=68 // pred_check_branch
          %230 = sbr.rel (%p228) target = $region77
        $region76: #{tpu_custom_call.1} parent=68 // pred_region
          %vm231 = vcmask 64512
          %232 = vst.msk [vmem:[#allocation2] sm:$0xff] %vm231, -inf
          %233 = vst.msk [vmem:[#allocation2 + $0x8] sm:$0xff] %vm231, -inf
          %234 = vst.msk [vmem:[#allocation2 + $0x10] sm:$0xff] %vm231, -inf
          %235 = vst.msk [vmem:[#allocation2 + $0x18] sm:$0xff] %vm231, -inf
          %236 = vst.msk [vmem:[#allocation2 + $0x20] sm:$0xff] %vm231, -inf
          %237 = vst.msk [vmem:[#allocation2 + $0x28] sm:$0xff] %vm231, -inf
          %238 = vst.msk [vmem:[#allocation2 + $0x30] sm:$0xff] %vm231, -inf
          %239 = vst.msk [vmem:[#allocation2 + $0x38] sm:$0xff] %vm231, -inf
          %240 = vst.msk [vmem:[#allocation2 + $0x40] sm:$0xff] %vm231, -inf
          %241 = vst.msk [vmem:[#allocation2 + $0x48] sm:$0xff] %vm231, -inf
          %242 = vst.msk [vmem:[#allocation2 + $0x50] sm:$0xff] %vm231, -inf
          %243 = vst.msk [vmem:[#allocation2 + $0x58] sm:$0xff] %vm231, -inf
          %244 = vst.msk [vmem:[#allocation2 + $0x60] sm:$0xff] %vm231, -inf
          %245 = vst.msk [vmem:[#allocation2 + $0x68] sm:$0xff] %vm231, -inf
          %246 = vst.msk [vmem:[#allocation2 + $0x70] sm:$0xff] %vm231, -inf
          %247 = vst.msk [vmem:[#allocation2 + $0x78] sm:$0xff] %vm231, -inf
        $region77: #{tpu_custom_call.1} parent=68 // pred_fallthru
          _
        %v248 = vld [vmem:[%s1] sm:$0xff]
        %v249 = vld [vmem:[%s1 + $0x8] sm:$0xff]
        %v250 = vld [vmem:[%s1 + $0x10] sm:$0xff]
        %v251 = vld [vmem:[%s1 + $0x18] sm:$0xff]
        %v252 = vld [vmem:[%s1 + $0x20] sm:$0xff]
        %v253 = vld [vmem:[%s1 + $0x28] sm:$0xff]
        %v254 = vld [vmem:[%s1 + $0x30] sm:$0xff]
        %v255 = vld [vmem:[%s1 + $0x38] sm:$0xff]
        %v256 = vld [vmem:[%s1 + $0x40] sm:$0xff]
        %v257 = vld [vmem:[%s1 + $0x48] sm:$0xff]
        %v258 = vld [vmem:[%s1 + $0x50] sm:$0xff]
        %v259 = vld [vmem:[%s1 + $0x58] sm:$0xff]
        %v260 = vld [vmem:[%s1 + $0x60] sm:$0xff]
        %v261 = vld [vmem:[%s1 + $0x68] sm:$0xff]
        %v262 = vld [vmem:[%s1 + $0x70] sm:$0xff]
        %v263 = vld [vmem:[%s1 + $0x78] sm:$0xff]
        %v264 = vld [vmem:[%s211] sm:$0x7]
        %266 = vset.pattern.permute.xlu0 0
        %267 = vperm.xlu0 %266, %v248
        %v268 = vpop.permute.xlu0 %267
        %271 = vset.pattern.permute.xlu0 0
        %272 = vperm.xlu0 %271, %v249
        %v273 = vpop.permute.xlu0 %272
        %276 = vset.pattern.permute.xlu0 0
        %277 = vperm.xlu0 %276, %v250
        %v278 = vpop.permute.xlu0 %277
        %281 = vset.pattern.permute.xlu0 0
        %282 = vperm.xlu0 %281, %v251
        %v283 = vpop.permute.xlu0 %282
        %286 = vset.pattern.permute.xlu0 0
        %287 = vperm.xlu0 %286, %v252
        %v288 = vpop.permute.xlu0 %287
        %291 = vset.pattern.permute.xlu0 0
        %292 = vperm.xlu0 %291, %v253
        %v293 = vpop.permute.xlu0 %292
        %296 = vset.pattern.permute.xlu0 0
        %297 = vperm.xlu0 %296, %v254
        %v298 = vpop.permute.xlu0 %297
        %301 = vset.pattern.permute.xlu0 0
        %302 = vperm.xlu0 %301, %v255
        %v303 = vpop.permute.xlu0 %302
        %306 = vset.pattern.permute.xlu0 0
        %307 = vperm.xlu0 %306, %v256
        %v308 = vpop.permute.xlu0 %307
        %311 = vset.pattern.permute.xlu0 0
        %312 = vperm.xlu0 %311, %v257
        %v313 = vpop.permute.xlu0 %312
        %316 = vset.pattern.permute.xlu0 0
        %317 = vperm.xlu0 %316, %v258
        %v318 = vpop.permute.xlu0 %317
        %321 = vset.pattern.permute.xlu0 0
        %322 = vperm.xlu0 %321, %v259
        %v323 = vpop.permute.xlu0 %322
        %326 = vset.pattern.permute.xlu0 0
        %327 = vperm.xlu0 %326, %v260
        %v328 = vpop.permute.xlu0 %327
        %331 = vset.pattern.permute.xlu0 0
        %332 = vperm.xlu0 %331, %v261
        %v333 = vpop.permute.xlu0 %332
        %336 = vset.pattern.permute.xlu0 0
        %337 = vperm.xlu0 %336, %v262
        %v338 = vpop.permute.xlu0 %337
        %341 = vset.pattern.permute.xlu0 0
        %342 = vperm.xlu0 %341, %v263
        %v343 = vpop.permute.xlu0 %342
        %v345 = vlaneseq
        %v346 = vshrl.u32 %v345, 7
        %v347 = vsub.s32 0, %v346
        %v348 = vrot.slane %v264, %v347
        %v349 = vmul.f32 %v268, %v348
        %v350 = vmul.f32 %v273, %v348
        %v351 = vmul.f32 %v278, %v348
        %v352 = vmul.f32 %v283, %v348
        %v353 = vmul.f32 %v288, %v348
        %v354 = vmul.f32 %v293, %v348
        %v355 = vmul.f32 %v298, %v348
        %v356 = vmul.f32 %v303, %v348
        %v357 = vmul.f32 %v308, %v348
        %v358 = vmul.f32 %v313, %v348
        %v359 = vmul.f32 %v318, %v348
        %v360 = vmul.f32 %v323, %v348
        %v361 = vmul.f32 %v328, %v348
        %v362 = vmul.f32 %v333, %v348
        %v363 = vmul.f32 %v338, %v348
        %v364 = vmul.f32 %v343, %v348
        %365 = vset.pattern.permute.xlu0 1
        %366 = vperm.xlu0 %365, %v248
        %v367 = vpop.permute.xlu0 %366
        %369 = vset.pattern.permute.xlu0 1
        %370 = vperm.xlu0 %369, %v249
        %v371 = vpop.permute.xlu0 %370
        %373 = vset.pattern.permute.xlu0 1
        %374 = vperm.xlu0 %373, %v250
        %v375 = vpop.permute.xlu0 %374
        %377 = vset.pattern.permute.xlu0 1
        %378 = vperm.xlu0 %377, %v251
        %v379 = vpop.permute.xlu0 %378
        %381 = vset.pattern.permute.xlu0 1
        %382 = vperm.xlu0 %381, %v252
        %v383 = vpop.permute.xlu0 %382
        %385 = vset.pattern.permute.xlu0 1
        %386 = vperm.xlu0 %385, %v253
        %v387 = vpop.permute.xlu0 %386
        %389 = vset.pattern.permute.xlu0 1
        %390 = vperm.xlu0 %389, %v254
        %v391 = vpop.permute.xlu0 %390
        %393 = vset.pattern.permute.xlu0 1
        %394 = vperm.xlu0 %393, %v255
        %v395 = vpop.permute.xlu0 %394
        %397 = vset.pattern.permute.xlu0 1
        %398 = vperm.xlu0 %397, %v256
        %v399 = vpop.permute.xlu0 %398
        %401 = vset.pattern.permute.xlu0 1
        %402 = vperm.xlu0 %401, %v257
        %v403 = vpop.permute.xlu0 %402
        %405 = vset.pattern.permute.xlu0 1
        %406 = vperm.xlu0 %405, %v258
        %v407 = vpop.permute.xlu0 %406
        %409 = vset.pattern.permute.xlu0 1
        %410 = vperm.xlu0 %409, %v259
        %v411 = vpop.permute.xlu0 %410
        %413 = vset.pattern.permute.xlu0 1
        %414 = vperm.xlu0 %413, %v260
        %v415 = vpop.permute.xlu0 %414
        %417 = vset.pattern.permute.xlu0 1
        %418 = vperm.xlu0 %417, %v261
        %v419 = vpop.permute.xlu0 %418
        %421 = vset.pattern.permute.xlu0 1
        %422 = vperm.xlu0 %421, %v262
        %v423 = vpop.permute.xlu0 %422
        %425 = vset.pattern.permute.xlu0 1
        %426 = vperm.xlu0 %425, %v263
        %v427 = vpop.permute.xlu0 %426
        %v429 = vlaneseq
        %v430 = vshrl.u32 %v429, 7
        %v431 = vsub.s32 1, %v430
        %v432 = vrot.slane %v264, %v431
        %v433 = vmul.f32 %v367, %v432
        %v434 = vmul.f32 %v371, %v432
        %v435 = vmul.f32 %v375, %v432
        %v436 = vmul.f32 %v379, %v432
        %v437 = vmul.f32 %v383, %v432
        %v438 = vmul.f32 %v387, %v432
        %v439 = vmul.f32 %v391, %v432
        %v440 = vmul.f32 %v395, %v432
        %v441 = vmul.f32 %v399, %v432
        %v442 = vmul.f32 %v403, %v432
        %v443 = vmul.f32 %v407, %v432
        %v444 = vmul.f32 %v411, %v432
        %v445 = vmul.f32 %v415, %v432
        %v446 = vmul.f32 %v419, %v432
        %v447 = vmul.f32 %v423, %v432
        %v448 = vmul.f32 %v427, %v432
        %v449 = vadd.f32 %v349, %v433
        %v450 = vadd.f32 %v350, %v434
        %v451 = vadd.f32 %v351, %v435
        %v452 = vadd.f32 %v352, %v436
        %v453 = vadd.f32 %v353, %v437
        %v454 = vadd.f32 %v354, %v438
        %v455 = vadd.f32 %v355, %v439
        %v456 = vadd.f32 %v356, %v440
        %v457 = vadd.f32 %v357, %v441
        %v458 = vadd.f32 %v358, %v442
        %v459 = vadd.f32 %v359, %v443
        %v460 = vadd.f32 %v360, %v444
        %v461 = vadd.f32 %v361, %v445
        %v462 = vadd.f32 %v362, %v446
        %v463 = vadd.f32 %v363, %v447
        %v464 = vadd.f32 %v364, %v448
        %465 = vset.pattern.permute.xlu0 2
        %466 = vperm.xlu0 %465, %v248
        %v467 = vpop.permute.xlu0 %466
        %469 = vset.pattern.permute.xlu0 2
        %470 = vperm.xlu0 %469, %v249
        %v471 = vpop.permute.xlu0 %470
        %473 = vset.pattern.permute.xlu0 2
        %474 = vperm.xlu0 %473, %v250
        %v475 = vpop.permute.xlu0 %474
        %477 = vset.pattern.permute.xlu0 2
        %478 = vperm.xlu0 %477, %v251
        %v479 = vpop.permute.xlu0 %478
        %481 = vset.pattern.permute.xlu0 2
        %482 = vperm.xlu0 %481, %v252
        %v483 = vpop.permute.xlu0 %482
        %485 = vset.pattern.permute.xlu0 2
        %486 = vperm.xlu0 %485, %v253
        %v487 = vpop.permute.xlu0 %486
        %489 = vset.pattern.permute.xlu0 2
        %490 = vperm.xlu0 %489, %v254
        %v491 = vpop.permute.xlu0 %490
        %493 = vset.pattern.permute.xlu0 2
        %494 = vperm.xlu0 %493, %v255
        %v495 = vpop.permute.xlu0 %494
        %497 = vset.pattern.permute.xlu0 2
        %498 = vperm.xlu0 %497, %v256
        %v499 = vpop.permute.xlu0 %498
        %501 = vset.pattern.permute.xlu0 2
        %502 = vperm.xlu0 %501, %v257
        %v503 = vpop.permute.xlu0 %502
        %505 = vset.pattern.permute.xlu0 2
        %506 = vperm.xlu0 %505, %v258
        %v507 = vpop.permute.xlu0 %506
        %509 = vset.pattern.permute.xlu0 2
        %510 = vperm.xlu0 %509, %v259
        %v511 = vpop.permute.xlu0 %510
        %513 = vset.pattern.permute.xlu0 2
        %514 = vperm.xlu0 %513, %v260
        %v515 = vpop.permute.xlu0 %514
        %517 = vset.pattern.permute.xlu0 2
        %518 = vperm.xlu0 %517, %v261
        %v519 = vpop.permute.xlu0 %518
        %521 = vset.pattern.permute.xlu0 2
        %522 = vperm.xlu0 %521, %v262
        %v523 = vpop.permute.xlu0 %522
        %525 = vset.pattern.permute.xlu0 2
        %526 = vperm.xlu0 %525, %v263
        %v527 = vpop.permute.xlu0 %526
        %v529 = vlaneseq
        %v530 = vshrl.u32 %v529, 7
        %v531 = vsub.s32 2, %v530
        %v532 = vrot.slane %v264, %v531
        %v533 = vmul.f32 %v467, %v532
        %v534 = vmul.f32 %v471, %v532
        %v535 = vmul.f32 %v475, %v532
        %v536 = vmul.f32 %v479, %v532
        %v537 = vmul.f32 %v483, %v532
        %v538 = vmul.f32 %v487, %v532
        %v539 = vmul.f32 %v491, %v532
        %v540 = vmul.f32 %v495, %v532
        %v541 = vmul.f32 %v499, %v532
        %v542 = vmul.f32 %v503, %v532
        %v543 = vmul.f32 %v507, %v532
        %v544 = vmul.f32 %v511, %v532
        %v545 = vmul.f32 %v515, %v532
        %v546 = vmul.f32 %v519, %v532
        %v547 = vmul.f32 %v523, %v532
        %v548 = vmul.f32 %v527, %v532
        %v549 = vadd.f32 %v449, %v533
        %v550 = vadd.f32 %v450, %v534
        %v551 = vadd.f32 %v451, %v535
        %v552 = vadd.f32 %v452, %v536
        %v553 = vadd.f32 %v453, %v537
        %v554 = vadd.f32 %v454, %v538
        %v555 = vadd.f32 %v455, %v539
        %v556 = vadd.f32 %v456, %v540
        %v557 = vadd.f32 %v457, %v541
        %v558 = vadd.f32 %v458, %v542
        %v559 = vadd.f32 %v459, %v543
        %v560 = vadd.f32 %v460, %v544
        %v561 = vadd.f32 %v461, %v545
        %v562 = vadd.f32 %v462, %v546
        %v563 = vadd.f32 %v463, %v547
        %v564 = vadd.f32 %v464, %v548
        %565 = vmax.xlane.f32.xlu0 %v549
        %v566 = vpop.xlane.xlu0 %565
        %567 = vmax.xlane.f32.xlu0 %v550
        %v568 = vpop.xlane.xlu0 %567
        %569 = vmax.xlane.f32.xlu0 %v551
        %v570 = vpop.xlane.xlu0 %569
        %571 = vmax.xlane.f32.xlu0 %v552
        %v572 = vpop.xlane.xlu0 %571
        %573 = vmax.xlane.f32.xlu0 %v553
        %v574 = vpop.xlane.xlu0 %573
        %575 = vmax.xlane.f32.xlu0 %v554
        %v576 = vpop.xlane.xlu0 %575
        %577 = vmax.xlane.f32.xlu0 %v555
        %v578 = vpop.xlane.xlu0 %577
        %579 = vmax.xlane.f32.xlu0 %v556
        %v580 = vpop.xlane.xlu0 %579
        %581 = vmax.xlane.f32.xlu0 %v557
        %v582 = vpop.xlane.xlu0 %581
        %583 = vmax.xlane.f32.xlu0 %v558
        %v584 = vpop.xlane.xlu0 %583
        %585 = vmax.xlane.f32.xlu0 %v559
        %v586 = vpop.xlane.xlu0 %585
        %587 = vmax.xlane.f32.xlu0 %v560
        %v588 = vpop.xlane.xlu0 %587
        %589 = vmax.xlane.f32.xlu0 %v561
        %v590 = vpop.xlane.xlu0 %589
        %591 = vmax.xlane.f32.xlu0 %v562
        %v592 = vpop.xlane.xlu0 %591
        %593 = vmax.xlane.f32.xlu0 %v563
        %v594 = vpop.xlane.xlu0 %593
        %595 = vmax.xlane.f32.xlu0 %v564
        %v596 = vpop.xlane.xlu0 %595
        %v597 = vld [vmem:[#allocation2] sm:$0xff]
        %v598 = vld [vmem:[#allocation2 + $0x8] sm:$0xff]
        %v599 = vld [vmem:[#allocation2 + $0x10] sm:$0xff]
        %v600 = vld [vmem:[#allocation2 + $0x18] sm:$0xff]
        %v601 = vld [vmem:[#allocation2 + $0x20] sm:$0xff]
        %v602 = vld [vmem:[#allocation2 + $0x28] sm:$0xff]
        %v603 = vld [vmem:[#allocation2 + $0x30] sm:$0xff]
        %v604 = vld [vmem:[#allocation2 + $0x38] sm:$0xff]
        %v605 = vld [vmem:[#allocation2 + $0x40] sm:$0xff]
        %v606 = vld [vmem:[#allocation2 + $0x48] sm:$0xff]
        %v607 = vld [vmem:[#allocation2 + $0x50] sm:$0xff]
        %v608 = vld [vmem:[#allocation2 + $0x58] sm:$0xff]
        %v609 = vld [vmem:[#allocation2 + $0x60] sm:$0xff]
        %v610 = vld [vmem:[#allocation2 + $0x68] sm:$0xff]
        %v611 = vld [vmem:[#allocation2 + $0x70] sm:$0xff]
        %v612 = vld [vmem:[#allocation2 + $0x78] sm:$0xff]
        %v613 = vmax.f32 %v597, %v566
        %v614 = vmax.f32 %v598, %v568
        %v615 = vmax.f32 %v599, %v570
        %v616 = vmax.f32 %v600, %v572
        %v617 = vmax.f32 %v601, %v574
        %v618 = vmax.f32 %v602, %v576
        %v619 = vmax.f32 %v603, %v578
        %v620 = vmax.f32 %v604, %v580
        %v621 = vmax.f32 %v605, %v582
        %v622 = vmax.f32 %v606, %v584
        %v623 = vmax.f32 %v607, %v586
        %v624 = vmax.f32 %v608, %v588
        %v625 = vmax.f32 %v609, %v590
        %v626 = vmax.f32 %v610, %v592
        %v627 = vmax.f32 %v611, %v594
        %v628 = vmax.f32 %v612, %v596
        %vm629 = vcmask 7168
        %630 = vst.msk [vmem:[#allocation2] sm:$0xff] %vm629, %v613
        %631 = vst.msk [vmem:[#allocation2 + $0x8] sm:$0xff] %vm629, %v614
        %632 = vst.msk [vmem:[#allocation2 + $0x10] sm:$0xff] %vm629, %v615
        %633 = vst.msk [vmem:[#allocation2 + $0x18] sm:$0xff] %vm629, %v616
        %634 = vst.msk [vmem:[#allocation2 + $0x20] sm:$0xff] %vm629, %v617
        %635 = vst.msk [vmem:[#allocation2 + $0x28] sm:$0xff] %vm629, %v618
        %636 = vst.msk [vmem:[#allocation2 + $0x30] sm:$0xff] %vm629, %v619
        %637 = vst.msk [vmem:[#allocation2 + $0x38] sm:$0xff] %vm629, %v620
        %638 = vst.msk [vmem:[#allocation2 + $0x40] sm:$0xff] %vm629, %v621
        %639 = vst.msk [vmem:[#allocation2 + $0x48] sm:$0xff] %vm629, %v622
        %640 = vst.msk [vmem:[#allocation2 + $0x50] sm:$0xff] %vm629, %v623
        %641 = vst.msk [vmem:[#allocation2 + $0x58] sm:$0xff] %vm629, %v624
        %642 = vst.msk [vmem:[#allocation2 + $0x60] sm:$0xff] %vm629, %v625
        %643 = vst.msk [vmem:[#allocation2 + $0x68] sm:$0xff] %vm629, %v626
        %644 = vst.msk [vmem:[#allocation2 + $0x70] sm:$0xff] %vm629, %v627
        %645 = vst.msk [vmem:[#allocation2 + $0x78] sm:$0xff] %vm629, %v628
        %s646 = scalar_lea.vmem %s211, 4 [#allocation3]
        %v647 = vld [vmem:[%s646] sm:$0x7]
        %v648 = vlaneseq
        %v649 = vshrl.u32 %v648, 7
        %v650 = vsub.s32 0, %v649
        %v651 = vrot.slane %v647, %v650
        %v652 = vmul.f32 %v268, %v651
        %v653 = vmul.f32 %v273, %v651
        %v654 = vmul.f32 %v278, %v651
        %v655 = vmul.f32 %v283, %v651
        %v656 = vmul.f32 %v288, %v651
        %v657 = vmul.f32 %v293, %v651
        %v658 = vmul.f32 %v298, %v651
        %v659 = vmul.f32 %v303, %v651
        %v660 = vmul.f32 %v308, %v651
        %v661 = vmul.f32 %v313, %v651
        %v662 = vmul.f32 %v318, %v651
        %v663 = vmul.f32 %v323, %v651
        %v664 = vmul.f32 %v328, %v651
        %v665 = vmul.f32 %v333, %v651
        %v666 = vmul.f32 %v338, %v651
        %v667 = vmul.f32 %v343, %v651
        %v668 = vlaneseq
        %v669 = vshrl.u32 %v668, 7
        %v670 = vsub.s32 1, %v669
        %v671 = vrot.slane %v647, %v670
        %v672 = vmul.f32 %v367, %v671
        %v673 = vmul.f32 %v371, %v671
        %v674 = vmul.f32 %v375, %v671
        %v675 = vmul.f32 %v379, %v671
        %v676 = vmul.f32 %v383, %v671
        %v677 = vmul.f32 %v387, %v671
        %v678 = vmul.f32 %v391, %v671
        %v679 = vmul.f32 %v395, %v671
        %v680 = vmul.f32 %v399, %v671
        %v681 = vmul.f32 %v403, %v671
        %v682 = vmul.f32 %v407, %v671
        %v683 = vmul.f32 %v411, %v671
        %v684 = vmul.f32 %v415, %v671
        %v685 = vmul.f32 %v419, %v671
        %v686 = vmul.f32 %v423, %v671
        %v687 = vmul.f32 %v427, %v671
        %v688 = vadd.f32 %v652, %v672
        %v689 = vadd.f32 %v653, %v673
        %v690 = vadd.f32 %v654, %v674
        %v691 = vadd.f32 %v655, %v675
        %v692 = vadd.f32 %v656, %v676
        %v693 = vadd.f32 %v657, %v677
        %v694 = vadd.f32 %v658, %v678
        %v695 = vadd.f32 %v659, %v679
        %v696 = vadd.f32 %v660, %v680
        %v697 = vadd.f32 %v661, %v681
        %v698 = vadd.f32 %v662, %v682
        %v699 = vadd.f32 %v663, %v683
        %v700 = vadd.f32 %v664, %v684
        %v701 = vadd.f32 %v665, %v685
        %v702 = vadd.f32 %v666, %v686
        %v703 = vadd.f32 %v667, %v687
        %v704 = vlaneseq
        %v705 = vshrl.u32 %v704, 7
        %v706 = vsub.s32 2, %v705
        %v707 = vrot.slane %v647, %v706
        %v708 = vmul.f32 %v467, %v707
        %v709 = vmul.f32 %v471, %v707
        %v710 = vmul.f32 %v475, %v707
        %v711 = vmul.f32 %v479, %v707
        %v712 = vmul.f32 %v483, %v707
        %v713 = vmul.f32 %v487, %v707
        %v714 = vmul.f32 %v491, %v707
        %v715 = vmul.f32 %v495, %v707
        %v716 = vmul.f32 %v499, %v707
        %v717 = vmul.f32 %v503, %v707
        %v718 = vmul.f32 %v507, %v707
        %v719 = vmul.f32 %v511, %v707
        %v720 = vmul.f32 %v515, %v707
        %v721 = vmul.f32 %v519, %v707
        %v722 = vmul.f32 %v523, %v707
        %v723 = vmul.f32 %v527, %v707
        %v724 = vadd.f32 %v688, %v708
        %v725 = vadd.f32 %v689, %v709
        %v726 = vadd.f32 %v690, %v710
        %v727 = vadd.f32 %v691, %v711
        %v728 = vadd.f32 %v692, %v712
        %v729 = vadd.f32 %v693, %v713
        %v730 = vadd.f32 %v694, %v714
        %v731 = vadd.f32 %v695, %v715
        %v732 = vadd.f32 %v696, %v716
        %v733 = vadd.f32 %v697, %v717
        %v734 = vadd.f32 %v698, %v718
        %v735 = vadd.f32 %v699, %v719
        %v736 = vadd.f32 %v700, %v720
        %v737 = vadd.f32 %v701, %v721
        %v738 = vadd.f32 %v702, %v722
        %v739 = vadd.f32 %v703, %v723
        %740 = vmax.xlane.f32.xlu0 %v724
        %v741 = vpop.xlane.xlu0 %740
        %742 = vmax.xlane.f32.xlu0 %v725
        %v743 = vpop.xlane.xlu0 %742
        %744 = vmax.xlane.f32.xlu0 %v726
        %v745 = vpop.xlane.xlu0 %744
        %746 = vmax.xlane.f32.xlu0 %v727
        %v747 = vpop.xlane.xlu0 %746
        %748 = vmax.xlane.f32.xlu0 %v728
        %v749 = vpop.xlane.xlu0 %748
        %750 = vmax.xlane.f32.xlu0 %v729
        %v751 = vpop.xlane.xlu0 %750
        %752 = vmax.xlane.f32.xlu0 %v730
        %v753 = vpop.xlane.xlu0 %752
        %754 = vmax.xlane.f32.xlu0 %v731
        %v755 = vpop.xlane.xlu0 %754
        %756 = vmax.xlane.f32.xlu0 %v732
        %v757 = vpop.xlane.xlu0 %756
        %758 = vmax.xlane.f32.xlu0 %v733
        %v759 = vpop.xlane.xlu0 %758
        %760 = vmax.xlane.f32.xlu0 %v734
        %v761 = vpop.xlane.xlu0 %760
        %762 = vmax.xlane.f32.xlu0 %v735
        %v763 = vpop.xlane.xlu0 %762
        %764 = vmax.xlane.f32.xlu0 %v736
        %v765 = vpop.xlane.xlu0 %764
        %766 = vmax.xlane.f32.xlu0 %v737
        %v767 = vpop.xlane.xlu0 %766
        %768 = vmax.xlane.f32.xlu0 %v738
        %v769 = vpop.xlane.xlu0 %768
        %770 = vmax.xlane.f32.xlu0 %v739
        %v771 = vpop.xlane.xlu0 %770
        %v772 = vld [vmem:[#allocation2] sm:$0xff]
        %v773 = vld [vmem:[#allocation2 + $0x8] sm:$0xff]
        %v774 = vld [vmem:[#allocation2 + $0x10] sm:$0xff]
        %v775 = vld [vmem:[#allocation2 + $0x18] sm:$0xff]
        %v776 = vld [vmem:[#allocation2 + $0x20] sm:$0xff]
        %v777 = vld [vmem:[#allocation2 + $0x28] sm:$0xff]
        %v778 = vld [vmem:[#allocation2 + $0x30] sm:$0xff]
        %v779 = vld [vmem:[#allocation2 + $0x38] sm:$0xff]
        %v780 = vld [vmem:[#allocation2 + $0x40] sm:$0xff]
        %v781 = vld [vmem:[#allocation2 + $0x48] sm:$0xff]
        %v782 = vld [vmem:[#allocation2 + $0x50] sm:$0xff]
        %v783 = vld [vmem:[#allocation2 + $0x58] sm:$0xff]
        %v784 = vld [vmem:[#allocation2 + $0x60] sm:$0xff]
        %v785 = vld [vmem:[#allocation2 + $0x68] sm:$0xff]
        %v786 = vld [vmem:[#allocation2 + $0x70] sm:$0xff]
        %v787 = vld [vmem:[#allocation2 + $0x78] sm:$0xff]
        %v788 = vmax.f32 %v772, %v741
        %v789 = vmax.f32 %v773, %v743
        %v790 = vmax.f32 %v774, %v745
        %v791 = vmax.f32 %v775, %v747
        %v792 = vmax.f32 %v776, %v749
        %v793 = vmax.f32 %v777, %v751
        %v794 = vmax.f32 %v778, %v753
        %v795 = vmax.f32 %v779, %v755
        %v796 = vmax.f32 %v780, %v757
        %v797 = vmax.f32 %v781, %v759
        %v798 = vmax.f32 %v782, %v761
        %v799 = vmax.f32 %v783, %v763
        %v800 = vmax.f32 %v784, %v765
        %v801 = vmax.f32 %v785, %v767
        %v802 = vmax.f32 %v786, %v769
        %v803 = vmax.f32 %v787, %v771
        %vm804 = vcmask 15368
        %805 = vst.msk [vmem:[#allocation2] sm:$0xff] %vm804, %v788
        %806 = vst.msk [vmem:[#allocation2 + $0x8] sm:$0xff] %vm804, %v789
        %807 = vst.msk [vmem:[#allocation2 + $0x10] sm:$0xff] %vm804, %v790
        %808 = vst.msk [vmem:[#allocation2 + $0x18] sm:$0xff] %vm804, %v791
        %809 = vst.msk [vmem:[#allocation2 + $0x20] sm:$0xff] %vm804, %v792
        %810 = vst.msk [vmem:[#allocation2 + $0x28] sm:$0xff] %vm804, %v793
        %811 = vst.msk [vmem:[#allocation2 + $0x30] sm:$0xff] %vm804, %v794
        %812 = vst.msk [vmem:[#allocation2 + $0x38] sm:$0xff] %vm804, %v795
        %813 = vst.msk [vmem:[#allocation2 + $0x40] sm:$0xff] %vm804, %v796
        %814 = vst.msk [vmem:[#allocation2 + $0x48] sm:$0xff] %vm804, %v797
        %815 = vst.msk [vmem:[#allocation2 + $0x50] sm:$0xff] %vm804, %v798
        %816 = vst.msk [vmem:[#allocation2 + $0x58] sm:$0xff] %vm804, %v799
        %817 = vst.msk [vmem:[#allocation2 + $0x60] sm:$0xff] %vm804, %v800
        %818 = vst.msk [vmem:[#allocation2 + $0x68] sm:$0xff] %vm804, %v801
        %819 = vst.msk [vmem:[#allocation2 + $0x70] sm:$0xff] %vm804, %v802
        %820 = vst.msk [vmem:[#allocation2 + $0x78] sm:$0xff] %vm804, %v803
        %s821 = scalar_lea.vmem %s211, 8 [#allocation3]
        %v822 = vld [vmem:[%s821] sm:$0x7]
        %v823 = vlaneseq
        %v824 = vshrl.u32 %v823, 7
        %v825 = vsub.s32 0, %v824
        %v826 = vrot.slane %v822, %v825
        %v827 = vmul.f32 %v268, %v826
        %v828 = vmul.f32 %v273, %v826
        %v829 = vmul.f32 %v278, %v826
        %v830 = vmul.f32 %v283, %v826
        %v831 = vmul.f32 %v288, %v826
        %v832 = vmul.f32 %v293, %v826
        %v833 = vmul.f32 %v298, %v826
        %v834 = vmul.f32 %v303, %v826
        %v835 = vmul.f32 %v308, %v826
        %v836 = vmul.f32 %v313, %v826
        %v837 = vmul.f32 %v318, %v826
        %v838 = vmul.f32 %v323, %v826
        %v839 = vmul.f32 %v328, %v826
        %v840 = vmul.f32 %v333, %v826
        %v841 = vmul.f32 %v338, %v826
        %v842 = vmul.f32 %v343, %v826
        %v843 = vlaneseq
        %v844 = vshrl.u32 %v843, 7
        %v845 = vsub.s32 1, %v844
        %v846 = vrot.slane %v822, %v845
        %v847 = vmul.f32 %v367, %v846
        %v848 = vmul.f32 %v371, %v846
        %v849 = vmul.f32 %v375, %v846
        %v850 = vmul.f32 %v379, %v846
        %v851 = vmul.f32 %v383, %v846
        %v852 = vmul.f32 %v387, %v846
        %v853 = vmul.f32 %v391, %v846
        %v854 = vmul.f32 %v395, %v846
        %v855 = vmul.f32 %v399, %v846
        %v856 = vmul.f32 %v403, %v846
        %v857 = vmul.f32 %v407, %v846
        %v858 = vmul.f32 %v411, %v846
        %v859 = vmul.f32 %v415, %v846
        %v860 = vmul.f32 %v419, %v846
        %v861 = vmul.f32 %v423, %v846
        %v862 = vmul.f32 %v427, %v846
        %v863 = vadd.f32 %v827, %v847
        %v864 = vadd.f32 %v828, %v848
        %v865 = vadd.f32 %v829, %v849
        %v866 = vadd.f32 %v830, %v850
        %v867 = vadd.f32 %v831, %v851
        %v868 = vadd.f32 %v832, %v852
        %v869 = vadd.f32 %v833, %v853
        %v870 = vadd.f32 %v834, %v854
        %v871 = vadd.f32 %v835, %v855
        %v872 = vadd.f32 %v836, %v856
        %v873 = vadd.f32 %v837, %v857
        %v874 = vadd.f32 %v838, %v858
        %v875 = vadd.f32 %v839, %v859
        %v876 = vadd.f32 %v840, %v860
        %v877 = vadd.f32 %v841, %v861
        %v878 = vadd.f32 %v842, %v862
        %v879 = vlaneseq
        %v880 = vshrl.u32 %v879, 7
        %v881 = vsub.s32 2, %v880
        %v882 = vrot.slane %v822, %v881
        %v883 = vmul.f32 %v467, %v882
        %v884 = vmul.f32 %v471, %v882
        %v885 = vmul.f32 %v475, %v882
        %v886 = vmul.f32 %v479, %v882
        %v887 = vmul.f32 %v483, %v882
        %v888 = vmul.f32 %v487, %v882
        %v889 = vmul.f32 %v491, %v882
        %v890 = vmul.f32 %v495, %v882
        %v891 = vmul.f32 %v499, %v882
        %v892 = vmul.f32 %v503, %v882
        %v893 = vmul.f32 %v507, %v882
        %v894 = vmul.f32 %v511, %v882
        %v895 = vmul.f32 %v515, %v882
        %v896 = vmul.f32 %v519, %v882
        %v897 = vmul.f32 %v523, %v882
        %v898 = vmul.f32 %v527, %v882
        %v899 = vadd.f32 %v863, %v883
        %v900 = vadd.f32 %v864, %v884
        %v901 = vadd.f32 %v865, %v885
        %v902 = vadd.f32 %v866, %v886
        %v903 = vadd.f32 %v867, %v887
        %v904 = vadd.f32 %v868, %v888
        %v905 = vadd.f32 %v869, %v889
        %v906 = vadd.f32 %v870, %v890
        %v907 = vadd.f32 %v871, %v891
        %v908 = vadd.f32 %v872, %v892
        %v909 = vadd.f32 %v873, %v893
        %v910 = vadd.f32 %v874, %v894
        %v911 = vadd.f32 %v875, %v895
        %v912 = vadd.f32 %v876, %v896
        %v913 = vadd.f32 %v877, %v897
        %v914 = vadd.f32 %v878, %v898
        %915 = vmax.xlane.f32.xlu0 %v899
        %v916 = vpop.xlane.xlu0 %915
        %917 = vmax.xlane.f32.xlu0 %v900
        %v918 = vpop.xlane.xlu0 %917
        %919 = vmax.xlane.f32.xlu0 %v901
        %v920 = vpop.xlane.xlu0 %919
        %921 = vmax.xlane.f32.xlu0 %v902
        %v922 = vpop.xlane.xlu0 %921
        %923 = vmax.xlane.f32.xlu0 %v903
        %v924 = vpop.xlane.xlu0 %923
        %925 = vmax.xlane.f32.xlu0 %v904
        %v926 = vpop.xlane.xlu0 %925
        %927 = vmax.xlane.f32.xlu0 %v905
        %v928 = vpop.xlane.xlu0 %927
        %929 = vmax.xlane.f32.xlu0 %v906
        %v930 = vpop.xlane.xlu0 %929
        %931 = vmax.xlane.f32.xlu0 %v907
        %v932 = vpop.xlane.xlu0 %931
        %933 = vmax.xlane.f32.xlu0 %v908
        %v934 = vpop.xlane.xlu0 %933
        %935 = vmax.xlane.f32.xlu0 %v909
        %v936 = vpop.xlane.xlu0 %935
        %937 = vmax.xlane.f32.xlu0 %v910
        %v938 = vpop.xlane.xlu0 %937
        %939 = vmax.xlane.f32.xlu0 %v911
        %v940 = vpop.xlane.xlu0 %939
        %941 = vmax.xlane.f32.xlu0 %v912
        %v942 = vpop.xlane.xlu0 %941
        %943 = vmax.xlane.f32.xlu0 %v913
        %v944 = vpop.xlane.xlu0 %943
        %945 = vmax.xlane.f32.xlu0 %v914
        %v946 = vpop.xlane.xlu0 %945
        %v947 = vld [vmem:[#allocation2] sm:$0xff]
        %v948 = vld [vmem:[#allocation2 + $0x8] sm:$0xff]
        %v949 = vld [vmem:[#allocation2 + $0x10] sm:$0xff]
        %v950 = vld [vmem:[#allocation2 + $0x18] sm:$0xff]
        %v951 = vld [vmem:[#allocation2 + $0x20] sm:$0xff]
        %v952 = vld [vmem:[#allocation2 + $0x28] sm:$0xff]
        %v953 = vld [vmem:[#allocation2 + $0x30] sm:$0xff]
        %v954 = vld [vmem:[#allocation2 + $0x38] sm:$0xff]
        %v955 = vld [vmem:[#allocation2 + $0x40] sm:$0xff]
        %v956 = vld [vmem:[#allocation2 + $0x48] sm:$0xff]
        %v957 = vld [vmem:[#allocation2 + $0x50] sm:$0xff]
        %v958 = vld [vmem:[#allocation2 + $0x58] sm:$0xff]
        %v959 = vld [vmem:[#allocation2 + $0x60] sm:$0xff]
        %v960 = vld [vmem:[#allocation2 + $0x68] sm:$0xff]
        %v961 = vld [vmem:[#allocation2 + $0x70] sm:$0xff]
        %v962 = vld [vmem:[#allocation2 + $0x78] sm:$0xff]
        %v963 = vmax.f32 %v947, %v916
        %v964 = vmax.f32 %v948, %v918
        %v965 = vmax.f32 %v949, %v920
        %v966 = vmax.f32 %v950, %v922
        %v967 = vmax.f32 %v951, %v924
        %v968 = vmax.f32 %v952, %v926
        %v969 = vmax.f32 %v953, %v928
        %v970 = vmax.f32 %v954, %v930
        %v971 = vmax.f32 %v955, %v932
        %v972 = vmax.f32 %v956, %v934
        %v973 = vmax.f32 %v957, %v936
        %v974 = vmax.f32 %v958, %v938
        %v975 = vmax.f32 %v959, %v940
        %v976 = vmax.f32 %v960, %v942
        %v977 = vmax.f32 %v961, %v944
        %v978 = vmax.f32 %v962, %v946
        %vm979 = vcmask 23568
        %980 = vst.msk [vmem:[#allocation2] sm:$0xff] %vm979, %v963
        %981 = vst.msk [vmem:[#allocation2 + $0x8] sm:$0xff] %vm979, %v964
        %982 = vst.msk [vmem:[#allocation2 + $0x10] sm:$0xff] %vm979, %v965
        %983 = vst.msk [vmem:[#allocation2 + $0x18] sm:$0xff] %vm979, %v966
        %984 = vst.msk [vmem:[#allocation2 + $0x20] sm:$0xff] %vm979, %v967
        %985 = vst.msk [vmem:[#allocation2 + $0x28] sm:$0xff] %vm979, %v968
        %986 = vst.msk [vmem:[#allocation2 + $0x30] sm:$0xff] %vm979, %v969
        %987 = vst.msk [vmem:[#allocation2 + $0x38] sm:$0xff] %vm979, %v970
        %988 = vst.msk [vmem:[#allocation2 + $0x40] sm:$0xff] %vm979, %v971
        %989 = vst.msk [vmem:[#allocation2 + $0x48] sm:$0xff] %vm979, %v972
        %990 = vst.msk [vmem:[#allocation2 + $0x50] sm:$0xff] %vm979, %v973
        %991 = vst.msk [vmem:[#allocation2 + $0x58] sm:$0xff] %vm979, %v974
        %992 = vst.msk [vmem:[#allocation2 + $0x60] sm:$0xff] %vm979, %v975
        %993 = vst.msk [vmem:[#allocation2 + $0x68] sm:$0xff] %vm979, %v976
        %994 = vst.msk [vmem:[#allocation2 + $0x70] sm:$0xff] %vm979, %v977
        %995 = vst.msk [vmem:[#allocation2 + $0x78] sm:$0xff] %vm979, %v978
        %s996 = scalar_lea.vmem %s211, 12 [#allocation3]
        %v997 = vld [vmem:[%s996] sm:$0x7]
        %v998 = vlaneseq
        %v999 = vshrl.u32 %v998, 7
        %v1000 = vsub.s32 0, %v999
        %v1001 = vrot.slane %v997, %v1000
        %v1002 = vmul.f32 %v268, %v1001
        %v1003 = vmul.f32 %v273, %v1001
        %v1004 = vmul.f32 %v278, %v1001
        %v1005 = vmul.f32 %v283, %v1001
        %v1006 = vmul.f32 %v288, %v1001
        %v1007 = vmul.f32 %v293, %v1001
        %v1008 = vmul.f32 %v298, %v1001
        %v1009 = vmul.f32 %v303, %v1001
        %v1010 = vmul.f32 %v308, %v1001
        %v1011 = vmul.f32 %v313, %v1001
        %v1012 = vmul.f32 %v318, %v1001
        %v1013 = vmul.f32 %v323, %v1001
        %v1014 = vmul.f32 %v328, %v1001
        %v1015 = vmul.f32 %v333, %v1001
        %v1016 = vmul.f32 %v338, %v1001
        %v1017 = vmul.f32 %v343, %v1001
        %v1018 = vlaneseq
        %v1019 = vshrl.u32 %v1018, 7
        %v1020 = vsub.s32 1, %v1019
        %v1021 = vrot.slane %v997, %v1020
        %v1022 = vmul.f32 %v367, %v1021
        %v1023 = vmul.f32 %v371, %v1021
        %v1024 = vmul.f32 %v375, %v1021
        %v1025 = vmul.f32 %v379, %v1021
        %v1026 = vmul.f32 %v383, %v1021
        %v1027 = vmul.f32 %v387, %v1021
        %v1028 = vmul.f32 %v391, %v1021
        %v1029 = vmul.f32 %v395, %v1021
        %v1030 = vmul.f32 %v399, %v1021
        %v1031 = vmul.f32 %v403, %v1021
        %v1032 = vmul.f32 %v407, %v1021
        %v1033 = vmul.f32 %v411, %v1021
        %v1034 = vmul.f32 %v415, %v1021
        %v1035 = vmul.f32 %v419, %v1021
        %v1036 = vmul.f32 %v423, %v1021
        %v1037 = vmul.f32 %v427, %v1021
        %v1038 = vadd.f32 %v1002, %v1022
        %v1039 = vadd.f32 %v1003, %v1023
        %v1040 = vadd.f32 %v1004, %v1024
        %v1041 = vadd.f32 %v1005, %v1025
        %v1042 = vadd.f32 %v1006, %v1026
        %v1043 = vadd.f32 %v1007, %v1027
        %v1044 = vadd.f32 %v1008, %v1028
        %v1045 = vadd.f32 %v1009, %v1029
        %v1046 = vadd.f32 %v1010, %v1030
        %v1047 = vadd.f32 %v1011, %v1031
        %v1048 = vadd.f32 %v1012, %v1032
        %v1049 = vadd.f32 %v1013, %v1033
        %v1050 = vadd.f32 %v1014, %v1034
        %v1051 = vadd.f32 %v1015, %v1035
        %v1052 = vadd.f32 %v1016, %v1036
        %v1053 = vadd.f32 %v1017, %v1037
        %v1054 = vlaneseq
        %v1055 = vshrl.u32 %v1054, 7
        %v1056 = vsub.s32 2, %v1055
        %v1057 = vrot.slane %v997, %v1056
        %v1058 = vmul.f32 %v467, %v1057
        %v1059 = vmul.f32 %v471, %v1057
        %v1060 = vmul.f32 %v475, %v1057
        %v1061 = vmul.f32 %v479, %v1057
        %v1062 = vmul.f32 %v483, %v1057
        %v1063 = vmul.f32 %v487, %v1057
        %v1064 = vmul.f32 %v491, %v1057
        %v1065 = vmul.f32 %v495, %v1057
        %v1066 = vmul.f32 %v499, %v1057
        %v1067 = vmul.f32 %v503, %v1057
        %v1068 = vmul.f32 %v507, %v1057
        %v1069 = vmul.f32 %v511, %v1057
        %v1070 = vmul.f32 %v515, %v1057
        %v1071 = vmul.f32 %v519, %v1057
        %v1072 = vmul.f32 %v523, %v1057
        %v1073 = vmul.f32 %v527, %v1057
        %v1074 = vadd.f32 %v1038, %v1058
        %v1075 = vadd.f32 %v1039, %v1059
        %v1076 = vadd.f32 %v1040, %v1060
        %v1077 = vadd.f32 %v1041, %v1061
        %v1078 = vadd.f32 %v1042, %v1062
        %v1079 = vadd.f32 %v1043, %v1063
        %v1080 = vadd.f32 %v1044, %v1064
        %v1081 = vadd.f32 %v1045, %v1065
        %v1082 = vadd.f32 %v1046, %v1066
        %v1083 = vadd.f32 %v1047, %v1067
        %v1084 = vadd.f32 %v1048, %v1068
        %v1085 = vadd.f32 %v1049, %v1069
        %v1086 = vadd.f32 %v1050, %v1070
        %v1087 = vadd.f32 %v1051, %v1071
        %v1088 = vadd.f32 %v1052, %v1072
        %v1089 = vadd.f32 %v1053, %v1073
        %1090 = vmax.xlane.f32.xlu0 %v1074
        %v1091 = vpop.xlane.xlu0 %1090
        %1092 = vmax.xlane.f32.xlu0 %v1075
        %v1093 = vpop.xlane.xlu0 %1092
        %1094 = vmax.xlane.f32.xlu0 %v1076
        %v1095 = vpop.xlane.xlu0 %1094
        %1096 = vmax.xlane.f32.xlu0 %v1077
        %v1097 = vpop.xlane.xlu0 %1096
        %1098 = vmax.xlane.f32.xlu0 %v1078
        %v1099 = vpop.xlane.xlu0 %1098
        %1100 = vmax.xlane.f32.xlu0 %v1079
        %v1101 = vpop.xlane.xlu0 %1100
        %1102 = vmax.xlane.f32.xlu0 %v1080
        %v1103 = vpop.xlane.xlu0 %1102
        %1104 = vmax.xlane.f32.xlu0 %v1081
        %v1105 = vpop.xlane.xlu0 %1104
        %1106 = vmax.xlane.f32.xlu0 %v1082
        %v1107 = vpop.xlane.xlu0 %1106
        %1108 = vmax.xlane.f32.xlu0 %v1083
        %v1109 = vpop.xlane.xlu0 %1108
        %1110 = vmax.xlane.f32.xlu0 %v1084
        %v1111 = vpop.xlane.xlu0 %1110
        %1112 = vmax.xlane.f32.xlu0 %v1085
        %v1113 = vpop.xlane.xlu0 %1112
        %1114 = vmax.xlane.f32.xlu0 %v1086
        %v1115 = vpop.xlane.xlu0 %1114
        %1116 = vmax.xlane.f32.xlu0 %v1087
        %v1117 = vpop.xlane.xlu0 %1116
        %1118 = vmax.xlane.f32.xlu0 %v1088
        %v1119 = vpop.xlane.xlu0 %1118
        %1120 = vmax.xlane.f32.xlu0 %v1089
        %v1121 = vpop.xlane.xlu0 %1120
        %v1122 = vld [vmem:[#allocation2] sm:$0xff]
        %v1123 = vld [vmem:[#allocation2 + $0x8] sm:$0xff]
        %v1124 = vld [vmem:[#allocation2 + $0x10] sm:$0xff]
        %v1125 = vld [vmem:[#allocation2 + $0x18] sm:$0xff]
        %v1126 = vld [vmem:[#allocation2 + $0x20] sm:$0xff]
        %v1127 = vld [vmem:[#allocation2 + $0x28] sm:$0xff]
        %v1128 = vld [vmem:[#allocation2 + $0x30] sm:$0xff]
        %v1129 = vld [vmem:[#allocation2 + $0x38] sm:$0xff]
        %v1130 = vld [vmem:[#allocation2 + $0x40] sm:$0xff]
        %v1131 = vld [vmem:[#allocation2 + $0x48] sm:$0xff]
        %v1132 = vld [vmem:[#allocation2 + $0x50] sm:$0xff]
        %v1133 = vld [vmem:[#allocation2 + $0x58] sm:$0xff]
        %v1134 = vld [vmem:[#allocation2 + $0x60] sm:$0xff]
        %v1135 = vld [vmem:[#allocation2 + $0x68] sm:$0xff]
        %v1136 = vld [vmem:[#allocation2 + $0x70] sm:$0xff]
        %v1137 = vld [vmem:[#allocation2 + $0x78] sm:$0xff]
        %v1138 = vmax.f32 %v1122, %v1091
        %v1139 = vmax.f32 %v1123, %v1093
        %v1140 = vmax.f32 %v1124, %v1095
        %v1141 = vmax.f32 %v1125, %v1097
        %v1142 = vmax.f32 %v1126, %v1099
        %v1143 = vmax.f32 %v1127, %v1101
        %v1144 = vmax.f32 %v1128, %v1103
        %v1145 = vmax.f32 %v1129, %v1105
        %v1146 = vmax.f32 %v1130, %v1107
        %v1147 = vmax.f32 %v1131, %v1109
        %v1148 = vmax.f32 %v1132, %v1111
        %v1149 = vmax.f32 %v1133, %v1113
        %v1150 = vmax.f32 %v1134, %v1115
        %v1151 = vmax.f32 %v1135, %v1117
        %v1152 = vmax.f32 %v1136, %v1119
        %v1153 = vmax.f32 %v1137, %v1121
        %vm1154 = vcmask 31768
        %1155 = vst.msk [vmem:[#allocation2] sm:$0xff] %vm1154, %v1138
        %1156 = vst.msk [vmem:[#allocation2 + $0x8] sm:$0xff] %vm1154, %v1139
        %1157 = vst.msk [vmem:[#allocation2 + $0x10] sm:$0xff] %vm1154, %v1140
        %1158 = vst.msk [vmem:[#allocation2 + $0x18] sm:$0xff] %vm1154, %v1141
        %1159 = vst.msk [vmem:[#allocation2 + $0x20] sm:$0xff] %vm1154, %v1142
        %1160 = vst.msk [vmem:[#allocation2 + $0x28] sm:$0xff] %vm1154, %v1143
        %1161 = vst.msk [vmem:[#allocation2 + $0x30] sm:$0xff] %vm1154, %v1144
        %1162 = vst.msk [vmem:[#allocation2 + $0x38] sm:$0xff] %vm1154, %v1145
        %1163 = vst.msk [vmem:[#allocation2 + $0x40] sm:$0xff] %vm1154, %v1146
        %1164 = vst.msk [vmem:[#allocation2 + $0x48] sm:$0xff] %vm1154, %v1147
        %1165 = vst.msk [vmem:[#allocation2 + $0x50] sm:$0xff] %vm1154, %v1148
        %1166 = vst.msk [vmem:[#allocation2 + $0x58] sm:$0xff] %vm1154, %v1149
        %1167 = vst.msk [vmem:[#allocation2 + $0x60] sm:$0xff] %vm1154, %v1150
        %1168 = vst.msk [vmem:[#allocation2 + $0x68] sm:$0xff] %vm1154, %v1151
        %1169 = vst.msk [vmem:[#allocation2 + $0x70] sm:$0xff] %vm1154, %v1152
        %1170 = vst.msk [vmem:[#allocation2 + $0x78] sm:$0xff] %vm1154, %v1153
        %s1171 = scalar_lea.vmem %s211, 16 [#allocation3]
        %v1172 = vld [vmem:[%s1171] sm:$0x7]
        %v1173 = vlaneseq
        %v1174 = vshrl.u32 %v1173, 7
        %v1175 = vsub.s32 0, %v1174
        %v1176 = vrot.slane %v1172, %v1175
        %v1177 = vmul.f32 %v268, %v1176
        %v1178 = vmul.f32 %v273, %v1176
        %v1179 = vmul.f32 %v278, %v1176
        %v1180 = vmul.f32 %v283, %v1176
        %v1181 = vmul.f32 %v288, %v1176
        %v1182 = vmul.f32 %v293, %v1176
        %v1183 = vmul.f32 %v298, %v1176
        %v1184 = vmul.f32 %v303, %v1176
        %v1185 = vmul.f32 %v308, %v1176
        %v1186 = vmul.f32 %v313, %v1176
        %v1187 = vmul.f32 %v318, %v1176
        %v1188 = vmul.f32 %v323, %v1176
        %v1189 = vmul.f32 %v328, %v1176
        %v1190 = vmul.f32 %v333, %v1176
        %v1191 = vmul.f32 %v338, %v1176
        %v1192 = vmul.f32 %v343, %v1176
        %v1193 = vlaneseq
        %v1194 = vshrl.u32 %v1193, 7
        %v1195 = vsub.s32 1, %v1194
        %v1196 = vrot.slane %v1172, %v1195
        %v1197 = vmul.f32 %v367, %v1196
        %v1198 = vmul.f32 %v371, %v1196
        %v1199 = vmul.f32 %v375, %v1196
        %v1200 = vmul.f32 %v379, %v1196
        %v1201 = vmul.f32 %v383, %v1196
        %v1202 = vmul.f32 %v387, %v1196
        %v1203 = vmul.f32 %v391, %v1196
        %v1204 = vmul.f32 %v395, %v1196
        %v1205 = vmul.f32 %v399, %v1196
        %v1206 = vmul.f32 %v403, %v1196
        %v1207 = vmul.f32 %v407, %v1196
        %v1208 = vmul.f32 %v411, %v1196
        %v1209 = vmul.f32 %v415, %v1196
        %v1210 = vmul.f32 %v419, %v1196
        %v1211 = vmul.f32 %v423, %v1196
        %v1212 = vmul.f32 %v427, %v1196
        %v1213 = vadd.f32 %v1177, %v1197
        %v1214 = vadd.f32 %v1178, %v1198
        %v1215 = vadd.f32 %v1179, %v1199
        %v1216 = vadd.f32 %v1180, %v1200
        %v1217 = vadd.f32 %v1181, %v1201
        %v1218 = vadd.f32 %v1182, %v1202
        %v1219 = vadd.f32 %v1183, %v1203
        %v1220 = vadd.f32 %v1184, %v1204
        %v1221 = vadd.f32 %v1185, %v1205
        %v1222 = vadd.f32 %v1186, %v1206
        %v1223 = vadd.f32 %v1187, %v1207
        %v1224 = vadd.f32 %v1188, %v1208
        %v1225 = vadd.f32 %v1189, %v1209
        %v1226 = vadd.f32 %v1190, %v1210
        %v1227 = vadd.f32 %v1191, %v1211
        %v1228 = vadd.f32 %v1192, %v1212
        %v1229 = vlaneseq
        %v1230 = vshrl.u32 %v1229, 7
        %v1231 = vsub.s32 2, %v1230
        %v1232 = vrot.slane %v1172, %v1231
        %v1233 = vmul.f32 %v467, %v1232
        %v1234 = vmul.f32 %v471, %v1232
        %v1235 = vmul.f32 %v475, %v1232
        %v1236 = vmul.f32 %v479, %v1232
        %v1237 = vmul.f32 %v483, %v1232
        %v1238 = vmul.f32 %v487, %v1232
        %v1239 = vmul.f32 %v491, %v1232
        %v1240 = vmul.f32 %v495, %v1232
        %v1241 = vmul.f32 %v499, %v1232
        %v1242 = vmul.f32 %v503, %v1232
        %v1243 = vmul.f32 %v507, %v1232
        %v1244 = vmul.f32 %v511, %v1232
        %v1245 = vmul.f32 %v515, %v1232
        %v1246 = vmul.f32 %v519, %v1232
        %v1247 = vmul.f32 %v523, %v1232
        %v1248 = vmul.f32 %v527, %v1232
        %v1249 = vadd.f32 %v1213, %v1233
        %v1250 = vadd.f32 %v1214, %v1234
        %v1251 = vadd.f32 %v1215, %v1235
        %v1252 = vadd.f32 %v1216, %v1236
        %v1253 = vadd.f32 %v1217, %v1237
        %v1254 = vadd.f32 %v1218, %v1238
        %v1255 = vadd.f32 %v1219, %v1239
        %v1256 = vadd.f32 %v1220, %v1240
        %v1257 = vadd.f32 %v1221, %v1241
        %v1258 = vadd.f32 %v1222, %v1242
        %v1259 = vadd.f32 %v1223, %v1243
        %v1260 = vadd.f32 %v1224, %v1244
        %v1261 = vadd.f32 %v1225, %v1245
        %v1262 = vadd.f32 %v1226, %v1246
        %v1263 = vadd.f32 %v1227, %v1247
        %v1264 = vadd.f32 %v1228, %v1248
        %1265 = vmax.xlane.f32.xlu0 %v1249
        %v1266 = vpop.xlane.xlu0 %1265
        %1267 = vmax.xlane.f32.xlu0 %v1250
        %v1268 = vpop.xlane.xlu0 %1267
        %1269 = vmax.xlane.f32.xlu0 %v1251
        %v1270 = vpop.xlane.xlu0 %1269
        %1271 = vmax.xlane.f32.xlu0 %v1252
        %v1272 = vpop.xlane.xlu0 %1271
        %1273 = vmax.xlane.f32.xlu0 %v1253
        %v1274 = vpop.xlane.xlu0 %1273
        %1275 = vmax.xlane.f32.xlu0 %v1254
        %v1276 = vpop.xlane.xlu0 %1275
        %1277 = vmax.xlane.f32.xlu0 %v1255
        %v1278 = vpop.xlane.xlu0 %1277
        %1279 = vmax.xlane.f32.xlu0 %v1256
        %v1280 = vpop.xlane.xlu0 %1279
        %1281 = vmax.xlane.f32.xlu0 %v1257
        %v1282 = vpop.xlane.xlu0 %1281
        %1283 = vmax.xlane.f32.xlu0 %v1258
        %v1284 = vpop.xlane.xlu0 %1283
        %1285 = vmax.xlane.f32.xlu0 %v1259
        %v1286 = vpop.xlane.xlu0 %1285
        %1287 = vmax.xlane.f32.xlu0 %v1260
        %v1288 = vpop.xlane.xlu0 %1287
        %1289 = vmax.xlane.f32.xlu0 %v1261
        %v1290 = vpop.xlane.xlu0 %1289
        %1291 = vmax.xlane.f32.xlu0 %v1262
        %v1292 = vpop.xlane.xlu0 %1291
        %1293 = vmax.xlane.f32.xlu0 %v1263
        %v1294 = vpop.xlane.xlu0 %1293
        %1295 = vmax.xlane.f32.xlu0 %v1264
        %v1296 = vpop.xlane.xlu0 %1295
        %v1297 = vld [vmem:[#allocation2] sm:$0xff]
        %v1298 = vld [vmem:[#allocation2 + $0x8] sm:$0xff]
        %v1299 = vld [vmem:[#allocation2 + $0x10] sm:$0xff]
        %v1300 = vld [vmem:[#allocation2 + $0x18] sm:$0xff]
        %v1301 = vld [vmem:[#allocation2 + $0x20] sm:$0xff]
        %v1302 = vld [vmem:[#allocation2 + $0x28] sm:$0xff]
        %v1303 = vld [vmem:[#allocation2 + $0x30] sm:$0xff]
        %v1304 = vld [vmem:[#allocation2 + $0x38] sm:$0xff]
        %v1305 = vld [vmem:[#allocation2 + $0x40] sm:$0xff]
        %v1306 = vld [vmem:[#allocation2 + $0x48] sm:$0xff]
        %v1307 = vld [vmem:[#allocation2 + $0x50] sm:$0xff]
        %v1308 = vld [vmem:[#allocation2 + $0x58] sm:$0xff]
        %v1309 = vld [vmem:[#allocation2 + $0x60] sm:$0xff]
        %v1310 = vld [vmem:[#allocation2 + $0x68] sm:$0xff]
        %v1311 = vld [vmem:[#allocation2 + $0x70] sm:$0xff]
        %v1312 = vld [vmem:[#allocation2 + $0x78] sm:$0xff]
        %v1313 = vmax.f32 %v1297, %v1266
        %v1314 = vmax.f32 %v1298, %v1268
        %v1315 = vmax.f32 %v1299, %v1270
        %v1316 = vmax.f32 %v1300, %v1272
        %v1317 = vmax.f32 %v1301, %v1274
        %v1318 = vmax.f32 %v1302, %v1276
        %v1319 = vmax.f32 %v1303, %v1278
        %v1320 = vmax.f32 %v1304, %v1280
        %v1321 = vmax.f32 %v1305, %v1282
        %v1322 = vmax.f32 %v1306, %v1284
        %v1323 = vmax.f32 %v1307, %v1286
        %v1324 = vmax.f32 %v1308, %v1288
        %v1325 = vmax.f32 %v1309, %v1290
        %v1326 = vmax.f32 %v1310, %v1292
        %v1327 = vmax.f32 %v1311, %v1294
        %v1328 = vmax.f32 %v1312, %v1296
        %vm1329 = vcmask 39968
        %1330 = vst.msk [vmem:[#allocation2] sm:$0xff] %vm1329, %v1313
        %1331 = vst.msk [vmem:[#allocation2 + $0x8] sm:$0xff] %vm1329, %v1314
        %1332 = vst.msk [vmem:[#allocation2 + $0x10] sm:$0xff] %vm1329, %v1315
        %1333 = vst.msk [vmem:[#allocation2 + $0x18] sm:$0xff] %vm1329, %v1316
        %1334 = vst.msk [vmem:[#allocation2 + $0x20] sm:$0xff] %vm1329, %v1317
        %1335 = vst.msk [vmem:[#allocation2 + $0x28] sm:$0xff] %vm1329, %v1318
        %1336 = vst.msk [vmem:[#allocation2 + $0x30] sm:$0xff] %vm1329, %v1319
        %1337 = vst.msk [vmem:[#allocation2 + $0x38] sm:$0xff] %vm1329, %v1320
        %1338 = vst.msk [vmem:[#allocation2 + $0x40] sm:$0xff] %vm1329, %v1321
        %1339 = vst.msk [vmem:[#allocation2 + $0x48] sm:$0xff] %vm1329, %v1322
        %1340 = vst.msk [vmem:[#allocation2 + $0x50] sm:$0xff] %vm1329, %v1323
        %1341 = vst.msk [vmem:[#allocation2 + $0x58] sm:$0xff] %vm1329, %v1324
        %1342 = vst.msk [vmem:[#allocation2 + $0x60] sm:$0xff] %vm1329, %v1325
        %1343 = vst.msk [vmem:[#allocation2 + $0x68] sm:$0xff] %vm1329, %v1326
        %1344 = vst.msk [vmem:[#allocation2 + $0x70] sm:$0xff] %vm1329, %v1327
        %1345 = vst.msk [vmem:[#allocation2 + $0x78] sm:$0xff] %vm1329, %v1328
        %s1346 = scalar_lea.vmem %s211, 20 [#allocation3]
        %v1347 = vld [vmem:[%s1346] sm:$0x7]
        %v1348 = vlaneseq
        %v1349 = vshrl.u32 %v1348, 7
        %v1350 = vsub.s32 0, %v1349
        %v1351 = vrot.slane %v1347, %v1350
        %v1352 = vmul.f32 %v268, %v1351
        %v1353 = vmul.f32 %v273, %v1351
        %v1354 = vmul.f32 %v278, %v1351
        %v1355 = vmul.f32 %v283, %v1351
        %v1356 = vmul.f32 %v288, %v1351
        %v1357 = vmul.f32 %v293, %v1351
        %v1358 = vmul.f32 %v298, %v1351
        %v1359 = vmul.f32 %v303, %v1351
        %v1360 = vmul.f32 %v308, %v1351
        %v1361 = vmul.f32 %v313, %v1351
        %v1362 = vmul.f32 %v318, %v1351
        %v1363 = vmul.f32 %v323, %v1351
        %v1364 = vmul.f32 %v328, %v1351
        %v1365 = vmul.f32 %v333, %v1351
        %v1366 = vmul.f32 %v338, %v1351
        %v1367 = vmul.f32 %v343, %v1351
        %v1368 = vlaneseq
        %v1369 = vshrl.u32 %v1368, 7
        %v1370 = vsub.s32 1, %v1369
        %v1371 = vrot.slane %v1347, %v1370
        %v1372 = vmul.f32 %v367, %v1371
        %v1373 = vmul.f32 %v371, %v1371
        %v1374 = vmul.f32 %v375, %v1371
        %v1375 = vmul.f32 %v379, %v1371
        %v1376 = vmul.f32 %v383, %v1371
        %v1377 = vmul.f32 %v387, %v1371
        %v1378 = vmul.f32 %v391, %v1371
        %v1379 = vmul.f32 %v395, %v1371
        %v1380 = vmul.f32 %v399, %v1371
        %v1381 = vmul.f32 %v403, %v1371
        %v1382 = vmul.f32 %v407, %v1371
        %v1383 = vmul.f32 %v411, %v1371
        %v1384 = vmul.f32 %v415, %v1371
        %v1385 = vmul.f32 %v419, %v1371
        %v1386 = vmul.f32 %v423, %v1371
        %v1387 = vmul.f32 %v427, %v1371
        %v1388 = vadd.f32 %v1352, %v1372
        %v1389 = vadd.f32 %v1353, %v1373
        %v1390 = vadd.f32 %v1354, %v1374
        %v1391 = vadd.f32 %v1355, %v1375
        %v1392 = vadd.f32 %v1356, %v1376
        %v1393 = vadd.f32 %v1357, %v1377
        %v1394 = vadd.f32 %v1358, %v1378
        %v1395 = vadd.f32 %v1359, %v1379
        %v1396 = vadd.f32 %v1360, %v1380
        %v1397 = vadd.f32 %v1361, %v1381
        %v1398 = vadd.f32 %v1362, %v1382
        %v1399 = vadd.f32 %v1363, %v1383
        %v1400 = vadd.f32 %v1364, %v1384
        %v1401 = vadd.f32 %v1365, %v1385
        %v1402 = vadd.f32 %v1366, %v1386
        %v1403 = vadd.f32 %v1367, %v1387
        %v1404 = vlaneseq
        %v1405 = vshrl.u32 %v1404, 7
        %v1406 = vsub.s32 2, %v1405
        %v1407 = vrot.slane %v1347, %v1406
        %v1408 = vmul.f32 %v467, %v1407
        %v1409 = vmul.f32 %v471, %v1407
        %v1410 = vmul.f32 %v475, %v1407
        %v1411 = vmul.f32 %v479, %v1407
        %v1412 = vmul.f32 %v483, %v1407
        %v1413 = vmul.f32 %v487, %v1407
        %v1414 = vmul.f32 %v491, %v1407
        %v1415 = vmul.f32 %v495, %v1407
        %v1416 = vmul.f32 %v499, %v1407
        %v1417 = vmul.f32 %v503, %v1407
        %v1418 = vmul.f32 %v507, %v1407
        %v1419 = vmul.f32 %v511, %v1407
        %v1420 = vmul.f32 %v515, %v1407
        %v1421 = vmul.f32 %v519, %v1407
        %v1422 = vmul.f32 %v523, %v1407
        %v1423 = vmul.f32 %v527, %v1407
        %v1424 = vadd.f32 %v1388, %v1408
        %v1425 = vadd.f32 %v1389, %v1409
        %v1426 = vadd.f32 %v1390, %v1410
        %v1427 = vadd.f32 %v1391, %v1411
        %v1428 = vadd.f32 %v1392, %v1412
        %v1429 = vadd.f32 %v1393, %v1413
        %v1430 = vadd.f32 %v1394, %v1414
        %v1431 = vadd.f32 %v1395, %v1415
        %v1432 = vadd.f32 %v1396, %v1416
        %v1433 = vadd.f32 %v1397, %v1417
        %v1434 = vadd.f32 %v1398, %v1418
        %v1435 = vadd.f32 %v1399, %v1419
        %v1436 = vadd.f32 %v1400, %v1420
        %v1437 = vadd.f32 %v1401, %v1421
        %v1438 = vadd.f32 %v1402, %v1422
        %v1439 = vadd.f32 %v1403, %v1423
        %1440 = vmax.xlane.f32.xlu0 %v1424
        %v1441 = vpop.xlane.xlu0 %1440
        %1442 = vmax.xlane.f32.xlu0 %v1425
        %v1443 = vpop.xlane.xlu0 %1442
        %1444 = vmax.xlane.f32.xlu0 %v1426
        %v1445 = vpop.xlane.xlu0 %1444
        %1446 = vmax.xlane.f32.xlu0 %v1427
        %v1447 = vpop.xlane.xlu0 %1446
        %1448 = vmax.xlane.f32.xlu0 %v1428
        %v1449 = vpop.xlane.xlu0 %1448
        %1450 = vmax.xlane.f32.xlu0 %v1429
        %v1451 = vpop.xlane.xlu0 %1450
        %1452 = vmax.xlane.f32.xlu0 %v1430
        %v1453 = vpop.xlane.xlu0 %1452
        %1454 = vmax.xlane.f32.xlu0 %v1431
        %v1455 = vpop.xlane.xlu0 %1454
        %1456 = vmax.xlane.f32.xlu0 %v1432
        %v1457 = vpop.xlane.xlu0 %1456
        %1458 = vmax.xlane.f32.xlu0 %v1433
        %v1459 = vpop.xlane.xlu0 %1458
        %1460 = vmax.xlane.f32.xlu0 %v1434
        %v1461 = vpop.xlane.xlu0 %1460
        %1462 = vmax.xlane.f32.xlu0 %v1435
        %v1463 = vpop.xlane.xlu0 %1462
        %1464 = vmax.xlane.f32.xlu0 %v1436
        %v1465 = vpop.xlane.xlu0 %1464
        %1466 = vmax.xlane.f32.xlu0 %v1437
        %v1467 = vpop.xlane.xlu0 %1466
        %1468 = vmax.xlane.f32.xlu0 %v1438
        %v1469 = vpop.xlane.xlu0 %1468
        %1470 = vmax.xlane.f32.xlu0 %v1439
        %v1471 = vpop.xlane.xlu0 %1470
        %v1472 = vld [vmem:[#allocation2] sm:$0xff]
        %v1473 = vld [vmem:[#allocation2 + $0x8] sm:$0xff]
        %v1474 = vld [vmem:[#allocation2 + $0x10] sm:$0xff]
        %v1475 = vld [vmem:[#allocation2 + $0x18] sm:$0xff]
        %v1476 = vld [vmem:[#allocation2 + $0x20] sm:$0xff]
        %v1477 = vld [vmem:[#allocation2 + $0x28] sm:$0xff]
        %v1478 = vld [vmem:[#allocation2 + $0x30] sm:$0xff]
        %v1479 = vld [vmem:[#allocation2 + $0x38] sm:$0xff]
        %v1480 = vld [vmem:[#allocation2 + $0x40] sm:$0xff]
        %v1481 = vld [vmem:[#allocation2 + $0x48] sm:$0xff]
        %v1482 = vld [vmem:[#allocation2 + $0x50] sm:$0xff]
        %v1483 = vld [vmem:[#allocation2 + $0x58] sm:$0xff]
        %v1484 = vld [vmem:[#allocation2 + $0x60] sm:$0xff]
        %v1485 = vld [vmem:[#allocation2 + $0x68] sm:$0xff]
        %v1486 = vld [vmem:[#allocation2 + $0x70] sm:$0xff]
        %v1487 = vld [vmem:[#allocation2 + $0x78] sm:$0xff]
        %v1488 = vmax.f32 %v1472, %v1441
        %v1489 = vmax.f32 %v1473, %v1443
        %v1490 = vmax.f32 %v1474, %v1445
        %v1491 = vmax.f32 %v1475, %v1447
        %v1492 = vmax.f32 %v1476, %v1449
        %v1493 = vmax.f32 %v1477, %v1451
        %v1494 = vmax.f32 %v1478, %v1453
        %v1495 = vmax.f32 %v1479, %v1455
        %v1496 = vmax.f32 %v1480, %v1457
        %v1497 = vmax.f32 %v1481, %v1459
        %v1498 = vmax.f32 %v1482, %v1461
        %v1499 = vmax.f32 %v1483, %v1463
        %v1500 = vmax.f32 %v1484, %v1465
        %v1501 = vmax.f32 %v1485, %v1467
        %v1502 = vmax.f32 %v1486, %v1469
        %v1503 = vmax.f32 %v1487, %v1471
        %vm1504 = vcmask 48168
        %1505 = vst.msk [vmem:[#allocation2] sm:$0xff] %vm1504, %v1488
        %1506 = vst.msk [vmem:[#allocation2 + $0x8] sm:$0xff] %vm1504, %v1489
        %1507 = vst.msk [vmem:[#allocation2 + $0x10] sm:$0xff] %vm1504, %v1490
        %1508 = vst.msk [vmem:[#allocation2 + $0x18] sm:$0xff] %vm1504, %v1491
        %1509 = vst.msk [vmem:[#allocation2 + $0x20] sm:$0xff] %vm1504, %v1492
        %1510 = vst.msk [vmem:[#allocation2 + $0x28] sm:$0xff] %vm1504, %v1493
        %1511 = vst.msk [vmem:[#allocation2 + $0x30] sm:$0xff] %vm1504, %v1494
        %1512 = vst.msk [vmem:[#allocation2 + $0x38] sm:$0xff] %vm1504, %v1495
        %1513 = vst.msk [vmem:[#allocation2 + $0x40] sm:$0xff] %vm1504, %v1496
        %1514 = vst.msk [vmem:[#allocation2 + $0x48] sm:$0xff] %vm1504, %v1497
        %1515 = vst.msk [vmem:[#allocation2 + $0x50] sm:$0xff] %vm1504, %v1498
        %1516 = vst.msk [vmem:[#allocation2 + $0x58] sm:$0xff] %vm1504, %v1499
        %1517 = vst.msk [vmem:[#allocation2 + $0x60] sm:$0xff] %vm1504, %v1500
        %1518 = vst.msk [vmem:[#allocation2 + $0x68] sm:$0xff] %vm1504, %v1501
        %1519 = vst.msk [vmem:[#allocation2 + $0x70] sm:$0xff] %vm1504, %v1502
        %1520 = vst.msk [vmem:[#allocation2 + $0x78] sm:$0xff] %vm1504, %v1503
        %s1521 = scalar_lea.vmem %s211, 24 [#allocation3]
        %v1522 = vld [vmem:[%s1521] sm:$0x7]
        %v1523 = vlaneseq
        %v1524 = vshrl.u32 %v1523, 7
        %v1525 = vsub.s32 0, %v1524
        %v1526 = vrot.slane %v1522, %v1525
        %v1527 = vmul.f32 %v268, %v1526
        %v1528 = vmul.f32 %v273, %v1526
        %v1529 = vmul.f32 %v278, %v1526
        %v1530 = vmul.f32 %v283, %v1526
        %v1531 = vmul.f32 %v288, %v1526
        %v1532 = vmul.f32 %v293, %v1526
        %v1533 = vmul.f32 %v298, %v1526
        %v1534 = vmul.f32 %v303, %v1526
        %v1535 = vmul.f32 %v308, %v1526
        %v1536 = vmul.f32 %v313, %v1526
        %v1537 = vmul.f32 %v318, %v1526
        %v1538 = vmul.f32 %v323, %v1526
        %v1539 = vmul.f32 %v328, %v1526
        %v1540 = vmul.f32 %v333, %v1526
        %v1541 = vmul.f32 %v338, %v1526
        %v1542 = vmul.f32 %v343, %v1526
        %v1543 = vlaneseq
        %v1544 = vshrl.u32 %v1543, 7
        %v1545 = vsub.s32 1, %v1544
        %v1546 = vrot.slane %v1522, %v1545
        %v1547 = vmul.f32 %v367, %v1546
        %v1548 = vmul.f32 %v371, %v1546
        %v1549 = vmul.f32 %v375, %v1546
        %v1550 = vmul.f32 %v379, %v1546
        %v1551 = vmul.f32 %v383, %v1546
        %v1552 = vmul.f32 %v387, %v1546
        %v1553 = vmul.f32 %v391, %v1546
        %v1554 = vmul.f32 %v395, %v1546
        %v1555 = vmul.f32 %v399, %v1546
        %v1556 = vmul.f32 %v403, %v1546
        %v1557 = vmul.f32 %v407, %v1546
        %v1558 = vmul.f32 %v411, %v1546
        %v1559 = vmul.f32 %v415, %v1546
        %v1560 = vmul.f32 %v419, %v1546
        %v1561 = vmul.f32 %v423, %v1546
        %v1562 = vmul.f32 %v427, %v1546
        %v1563 = vadd.f32 %v1527, %v1547
        %v1564 = vadd.f32 %v1528, %v1548
        %v1565 = vadd.f32 %v1529, %v1549
        %v1566 = vadd.f32 %v1530, %v1550
        %v1567 = vadd.f32 %v1531, %v1551
        %v1568 = vadd.f32 %v1532, %v1552
        %v1569 = vadd.f32 %v1533, %v1553
        %v1570 = vadd.f32 %v1534, %v1554
        %v1571 = vadd.f32 %v1535, %v1555
        %v1572 = vadd.f32 %v1536, %v1556
        %v1573 = vadd.f32 %v1537, %v1557
        %v1574 = vadd.f32 %v1538, %v1558
        %v1575 = vadd.f32 %v1539, %v1559
        %v1576 = vadd.f32 %v1540, %v1560
        %v1577 = vadd.f32 %v1541, %v1561
        %v1578 = vadd.f32 %v1542, %v1562
        %v1579 = vlaneseq
        %v1580 = vshrl.u32 %v1579, 7
        %v1581 = vsub.s32 2, %v1580
        %v1582 = vrot.slane %v1522, %v1581
        %v1583 = vmul.f32 %v467, %v1582
        %v1584 = vmul.f32 %v471, %v1582
        %v1585 = vmul.f32 %v475, %v1582
        %v1586 = vmul.f32 %v479, %v1582
        %v1587 = vmul.f32 %v483, %v1582
        %v1588 = vmul.f32 %v487, %v1582
        %v1589 = vmul.f32 %v491, %v1582
        %v1590 = vmul.f32 %v495, %v1582
        %v1591 = vmul.f32 %v499, %v1582
        %v1592 = vmul.f32 %v503, %v1582
        %v1593 = vmul.f32 %v507, %v1582
        %v1594 = vmul.f32 %v511, %v1582
        %v1595 = vmul.f32 %v515, %v1582
        %v1596 = vmul.f32 %v519, %v1582
        %v1597 = vmul.f32 %v523, %v1582
        %v1598 = vmul.f32 %v527, %v1582
        %v1599 = vadd.f32 %v1563, %v1583
        %v1600 = vadd.f32 %v1564, %v1584
        %v1601 = vadd.f32 %v1565, %v1585
        %v1602 = vadd.f32 %v1566, %v1586
        %v1603 = vadd.f32 %v1567, %v1587
        %v1604 = vadd.f32 %v1568, %v1588
        %v1605 = vadd.f32 %v1569, %v1589
        %v1606 = vadd.f32 %v1570, %v1590
        %v1607 = vadd.f32 %v1571, %v1591
        %v1608 = vadd.f32 %v1572, %v1592
        %v1609 = vadd.f32 %v1573, %v1593
        %v1610 = vadd.f32 %v1574, %v1594
        %v1611 = vadd.f32 %v1575, %v1595
        %v1612 = vadd.f32 %v1576, %v1596
        %v1613 = vadd.f32 %v1577, %v1597
        %v1614 = vadd.f32 %v1578, %v1598
        %1615 = vmax.xlane.f32.xlu0 %v1599
        %v1616 = vpop.xlane.xlu0 %1615
        %1617 = vmax.xlane.f32.xlu0 %v1600
        %v1618 = vpop.xlane.xlu0 %1617
        %1619 = vmax.xlane.f32.xlu0 %v1601
        %v1620 = vpop.xlane.xlu0 %1619
        %1621 = vmax.xlane.f32.xlu0 %v1602
        %v1622 = vpop.xlane.xlu0 %1621
        %1623 = vmax.xlane.f32.xlu0 %v1603
        %v1624 = vpop.xlane.xlu0 %1623
        %1625 = vmax.xlane.f32.xlu0 %v1604
        %v1626 = vpop.xlane.xlu0 %1625
        %1627 = vmax.xlane.f32.xlu0 %v1605
        %v1628 = vpop.xlane.xlu0 %1627
        %1629 = vmax.xlane.f32.xlu0 %v1606
        %v1630 = vpop.xlane.xlu0 %1629
        %1631 = vmax.xlane.f32.xlu0 %v1607
        %v1632 = vpop.xlane.xlu0 %1631
        %1633 = vmax.xlane.f32.xlu0 %v1608
        %v1634 = vpop.xlane.xlu0 %1633
        %1635 = vmax.xlane.f32.xlu0 %v1609
        %v1636 = vpop.xlane.xlu0 %1635
        %1637 = vmax.xlane.f32.xlu0 %v1610
        %v1638 = vpop.xlane.xlu0 %1637
        %1639 = vmax.xlane.f32.xlu0 %v1611
        %v1640 = vpop.xlane.xlu0 %1639
        %1641 = vmax.xlane.f32.xlu0 %v1612
        %v1642 = vpop.xlane.xlu0 %1641
        %1643 = vmax.xlane.f32.xlu0 %v1613
        %v1644 = vpop.xlane.xlu0 %1643
        %1645 = vmax.xlane.f32.xlu0 %v1614
        %v1646 = vpop.xlane.xlu0 %1645
        %v1647 = vld [vmem:[#allocation2] sm:$0xff]
        %v1648 = vld [vmem:[#allocation2 + $0x8] sm:$0xff]
        %v1649 = vld [vmem:[#allocation2 + $0x10] sm:$0xff]
        %v1650 = vld [vmem:[#allocation2 + $0x18] sm:$0xff]
        %v1651 = vld [vmem:[#allocation2 + $0x20] sm:$0xff]
        %v1652 = vld [vmem:[#allocation2 + $0x28] sm:$0xff]
        %v1653 = vld [vmem:[#allocation2 + $0x30] sm:$0xff]
        %v1654 = vld [vmem:[#allocation2 + $0x38] sm:$0xff]
        %v1655 = vld [vmem:[#allocation2 + $0x40] sm:$0xff]
        %v1656 = vld [vmem:[#allocation2 + $0x48] sm:$0xff]
        %v1657 = vld [vmem:[#allocation2 + $0x50] sm:$0xff]
        %v1658 = vld [vmem:[#allocation2 + $0x58] sm:$0xff]
        %v1659 = vld [vmem:[#allocation2 + $0x60] sm:$0xff]
        %v1660 = vld [vmem:[#allocation2 + $0x68] sm:$0xff]
        %v1661 = vld [vmem:[#allocation2 + $0x70] sm:$0xff]
        %v1662 = vld [vmem:[#allocation2 + $0x78] sm:$0xff]
        %v1663 = vmax.f32 %v1647, %v1616
        %v1664 = vmax.f32 %v1648, %v1618
        %v1665 = vmax.f32 %v1649, %v1620
        %v1666 = vmax.f32 %v1650, %v1622
        %v1667 = vmax.f32 %v1651, %v1624
        %v1668 = vmax.f32 %v1652, %v1626
        %v1669 = vmax.f32 %v1653, %v1628
        %v1670 = vmax.f32 %v1654, %v1630
        %v1671 = vmax.f32 %v1655, %v1632
        %v1672 = vmax.f32 %v1656, %v1634
        %v1673 = vmax.f32 %v1657, %v1636
        %v1674 = vmax.f32 %v1658, %v1638
        %v1675 = vmax.f32 %v1659, %v1640
        %v1676 = vmax.f32 %v1660, %v1642
        %v1677 = vmax.f32 %v1661, %v1644
        %v1678 = vmax.f32 %v1662, %v1646
        %vm1679 = vcmask 56368
        %1680 = vst.msk [vmem:[#allocation2] sm:$0xff] %vm1679, %v1663
        %1681 = vst.msk [vmem:[#allocation2 + $0x8] sm:$0xff] %vm1679, %v1664
        %1682 = vst.msk [vmem:[#allocation2 + $0x10] sm:$0xff] %vm1679, %v1665
        %1683 = vst.msk [vmem:[#allocation2 + $0x18] sm:$0xff] %vm1679, %v1666
        %1684 = vst.msk [vmem:[#allocation2 + $0x20] sm:$0xff] %vm1679, %v1667
        %1685 = vst.msk [vmem:[#allocation2 + $0x28] sm:$0xff] %vm1679, %v1668
        %1686 = vst.msk [vmem:[#allocation2 + $0x30] sm:$0xff] %vm1679, %v1669
        %1687 = vst.msk [vmem:[#allocation2 + $0x38] sm:$0xff] %vm1679, %v1670
        %1688 = vst.msk [vmem:[#allocation2 + $0x40] sm:$0xff] %vm1679, %v1671
        %1689 = vst.msk [vmem:[#allocation2 + $0x48] sm:$0xff] %vm1679, %v1672
        %1690 = vst.msk [vmem:[#allocation2 + $0x50] sm:$0xff] %vm1679, %v1673
        %1691 = vst.msk [vmem:[#allocation2 + $0x58] sm:$0xff] %vm1679, %v1674
        %1692 = vst.msk [vmem:[#allocation2 + $0x60] sm:$0xff] %vm1679, %v1675
        %1693 = vst.msk [vmem:[#allocation2 + $0x68] sm:$0xff] %vm1679, %v1676
        %1694 = vst.msk [vmem:[#allocation2 + $0x70] sm:$0xff] %vm1679, %v1677
        %1695 = vst.msk [vmem:[#allocation2 + $0x78] sm:$0xff] %vm1679, %v1678
        %s1696 = scalar_lea.vmem %s211, 28 [#allocation3]
        %v1697 = vld [vmem:[%s1696] sm:$0x7]
        %v1698 = vlaneseq
        %v1699 = vshrl.u32 %v1698, 7
        %v1700 = vsub.s32 0, %v1699
        %v1701 = vrot.slane %v1697, %v1700
        %v1702 = vmul.f32 %v268, %v1701
        %v1703 = vmul.f32 %v273, %v1701
        %v1704 = vmul.f32 %v278, %v1701
        %v1705 = vmul.f32 %v283, %v1701
        %v1706 = vmul.f32 %v288, %v1701
        %v1707 = vmul.f32 %v293, %v1701
        %v1708 = vmul.f32 %v298, %v1701
        %v1709 = vmul.f32 %v303, %v1701
        %v1710 = vmul.f32 %v308, %v1701
        %v1711 = vmul.f32 %v313, %v1701
        %v1712 = vmul.f32 %v318, %v1701
        %v1713 = vmul.f32 %v323, %v1701
        %v1714 = vmul.f32 %v328, %v1701
        %v1715 = vmul.f32 %v333, %v1701
        %v1716 = vmul.f32 %v338, %v1701
        %v1717 = vmul.f32 %v343, %v1701
        %v1718 = vlaneseq
        %v1719 = vshrl.u32 %v1718, 7
        %v1720 = vsub.s32 1, %v1719
        %v1721 = vrot.slane %v1697, %v1720
        %v1722 = vmul.f32 %v367, %v1721
        %v1723 = vmul.f32 %v371, %v1721
        %v1724 = vmul.f32 %v375, %v1721
        %v1725 = vmul.f32 %v379, %v1721
        %v1726 = vmul.f32 %v383, %v1721
        %v1727 = vmul.f32 %v387, %v1721
        %v1728 = vmul.f32 %v391, %v1721
        %v1729 = vmul.f32 %v395, %v1721
        %v1730 = vmul.f32 %v399, %v1721
        %v1731 = vmul.f32 %v403, %v1721
        %v1732 = vmul.f32 %v407, %v1721
        %v1733 = vmul.f32 %v411, %v1721
        %v1734 = vmul.f32 %v415, %v1721
        %v1735 = vmul.f32 %v419, %v1721
        %v1736 = vmul.f32 %v423, %v1721
        %v1737 = vmul.f32 %v427, %v1721
        %v1738 = vadd.f32 %v1702, %v1722
        %v1739 = vadd.f32 %v1703, %v1723
        %v1740 = vadd.f32 %v1704, %v1724
        %v1741 = vadd.f32 %v1705, %v1725
        %v1742 = vadd.f32 %v1706, %v1726
        %v1743 = vadd.f32 %v1707, %v1727
        %v1744 = vadd.f32 %v1708, %v1728
        %v1745 = vadd.f32 %v1709, %v1729
        %v1746 = vadd.f32 %v1710, %v1730
        %v1747 = vadd.f32 %v1711, %v1731
        %v1748 = vadd.f32 %v1712, %v1732
        %v1749 = vadd.f32 %v1713, %v1733
        %v1750 = vadd.f32 %v1714, %v1734
        %v1751 = vadd.f32 %v1715, %v1735
        %v1752 = vadd.f32 %v1716, %v1736
        %v1753 = vadd.f32 %v1717, %v1737
        %v1754 = vlaneseq
        %v1755 = vshrl.u32 %v1754, 7
        %v1756 = vsub.s32 2, %v1755
        %v1757 = vrot.slane %v1697, %v1756
        %v1758 = vmul.f32 %v467, %v1757
        %v1759 = vmul.f32 %v471, %v1757
        %v1760 = vmul.f32 %v475, %v1757
        %v1761 = vmul.f32 %v479, %v1757
        %v1762 = vmul.f32 %v483, %v1757
        %v1763 = vmul.f32 %v487, %v1757
        %v1764 = vmul.f32 %v491, %v1757
        %v1765 = vmul.f32 %v495, %v1757
        %v1766 = vmul.f32 %v499, %v1757
        %v1767 = vmul.f32 %v503, %v1757
        %v1768 = vmul.f32 %v507, %v1757
        %v1769 = vmul.f32 %v511, %v1757
        %v1770 = vmul.f32 %v515, %v1757
        %v1771 = vmul.f32 %v519, %v1757
        %v1772 = vmul.f32 %v523, %v1757
        %v1773 = vmul.f32 %v527, %v1757
        %v1774 = vadd.f32 %v1738, %v1758
        %v1775 = vadd.f32 %v1739, %v1759
        %v1776 = vadd.f32 %v1740, %v1760
        %v1777 = vadd.f32 %v1741, %v1761
        %v1778 = vadd.f32 %v1742, %v1762
        %v1779 = vadd.f32 %v1743, %v1763
        %v1780 = vadd.f32 %v1744, %v1764
        %v1781 = vadd.f32 %v1745, %v1765
        %v1782 = vadd.f32 %v1746, %v1766
        %v1783 = vadd.f32 %v1747, %v1767
        %v1784 = vadd.f32 %v1748, %v1768
        %v1785 = vadd.f32 %v1749, %v1769
        %v1786 = vadd.f32 %v1750, %v1770
        %v1787 = vadd.f32 %v1751, %v1771
        %v1788 = vadd.f32 %v1752, %v1772
        %v1789 = vadd.f32 %v1753, %v1773
        %1790 = vmax.xlane.f32.xlu0 %v1774
        %v1791 = vpop.xlane.xlu0 %1790
        %1792 = vmax.xlane.f32.xlu0 %v1775
        %v1793 = vpop.xlane.xlu0 %1792
        %1794 = vmax.xlane.f32.xlu0 %v1776
        %v1795 = vpop.xlane.xlu0 %1794
        %1796 = vmax.xlane.f32.xlu0 %v1777
        %v1797 = vpop.xlane.xlu0 %1796
        %1798 = vmax.xlane.f32.xlu0 %v1778
        %v1799 = vpop.xlane.xlu0 %1798
        %1800 = vmax.xlane.f32.xlu0 %v1779
        %v1801 = vpop.xlane.xlu0 %1800
        %1802 = vmax.xlane.f32.xlu0 %v1780
        %v1803 = vpop.xlane.xlu0 %1802
        %1804 = vmax.xlane.f32.xlu0 %v1781
        %v1805 = vpop.xlane.xlu0 %1804
        %1806 = vmax.xlane.f32.xlu0 %v1782
        %v1807 = vpop.xlane.xlu0 %1806
        %1808 = vmax.xlane.f32.xlu0 %v1783
        %v1809 = vpop.xlane.xlu0 %1808
        %1810 = vmax.xlane.f32.xlu0 %v1784
        %v1811 = vpop.xlane.xlu0 %1810
        %1812 = vmax.xlane.f32.xlu0 %v1785
        %v1813 = vpop.xlane.xlu0 %1812
        %1814 = vmax.xlane.f32.xlu0 %v1786
        %v1815 = vpop.xlane.xlu0 %1814
        %1816 = vmax.xlane.f32.xlu0 %v1787
        %v1817 = vpop.xlane.xlu0 %1816
        %1818 = vmax.xlane.f32.xlu0 %v1788
        %v1819 = vpop.xlane.xlu0 %1818
        %1820 = vmax.xlane.f32.xlu0 %v1789
        %v1821 = vpop.xlane.xlu0 %1820
        %v1822 = vld [vmem:[#allocation2] sm:$0xff]
        %v1823 = vld [vmem:[#allocation2 + $0x8] sm:$0xff]
        %v1824 = vld [vmem:[#allocation2 + $0x10] sm:$0xff]
        %v1825 = vld [vmem:[#allocation2 + $0x18] sm:$0xff]
        %v1826 = vld [vmem:[#allocation2 + $0x20] sm:$0xff]
        %v1827 = vld [vmem:[#allocation2 + $0x28] sm:$0xff]
        %v1828 = vld [vmem:[#allocation2 + $0x30] sm:$0xff]
        %v1829 = vld [vmem:[#allocation2 + $0x38] sm:$0xff]
        %v1830 = vld [vmem:[#allocation2 + $0x40] sm:$0xff]
        %v1831 = vld [vmem:[#allocation2 + $0x48] sm:$0xff]
        %v1832 = vld [vmem:[#allocation2 + $0x50] sm:$0xff]
        %v1833 = vld [vmem:[#allocation2 + $0x58] sm:$0xff]
        %v1834 = vld [vmem:[#allocation2 + $0x60] sm:$0xff]
        %v1835 = vld [vmem:[#allocation2 + $0x68] sm:$0xff]
        %v1836 = vld [vmem:[#allocation2 + $0x70] sm:$0xff]
        %v1837 = vld [vmem:[#allocation2 + $0x78] sm:$0xff]
        %v1838 = vmax.f32 %v1822, %v1791
        %v1839 = vmax.f32 %v1823, %v1793
        %v1840 = vmax.f32 %v1824, %v1795
        %v1841 = vmax.f32 %v1825, %v1797
        %v1842 = vmax.f32 %v1826, %v1799
        %v1843 = vmax.f32 %v1827, %v1801
        %v1844 = vmax.f32 %v1828, %v1803
        %v1845 = vmax.f32 %v1829, %v1805
        %v1846 = vmax.f32 %v1830, %v1807
        %v1847 = vmax.f32 %v1831, %v1809
        %v1848 = vmax.f32 %v1832, %v1811
        %v1849 = vmax.f32 %v1833, %v1813
        %v1850 = vmax.f32 %v1834, %v1815
        %v1851 = vmax.f32 %v1835, %v1817
        %v1852 = vmax.f32 %v1836, %v1819
        %v1853 = vmax.f32 %v1837, %v1821
        %vm1854 = vcmask 64568
        %1855 = vst.msk [vmem:[#allocation2] sm:$0xff] %vm1854, %v1838
        %1856 = vst.msk [vmem:[#allocation2 + $0x8] sm:$0xff] %vm1854, %v1839
        %1857 = vst.msk [vmem:[#allocation2 + $0x10] sm:$0xff] %vm1854, %v1840
        %1858 = vst.msk [vmem:[#allocation2 + $0x18] sm:$0xff] %vm1854, %v1841
        %1859 = vst.msk [vmem:[#allocation2 + $0x20] sm:$0xff] %vm1854, %v1842
        %1860 = vst.msk [vmem:[#allocation2 + $0x28] sm:$0xff] %vm1854, %v1843
        %1861 = vst.msk [vmem:[#allocation2 + $0x30] sm:$0xff] %vm1854, %v1844
        %1862 = vst.msk [vmem:[#allocation2 + $0x38] sm:$0xff] %vm1854, %v1845
        %1863 = vst.msk [vmem:[#allocation2 + $0x40] sm:$0xff] %vm1854, %v1846
        %1864 = vst.msk [vmem:[#allocation2 + $0x48] sm:$0xff] %vm1854, %v1847
        %1865 = vst.msk [vmem:[#allocation2 + $0x50] sm:$0xff] %vm1854, %v1848
        %1866 = vst.msk [vmem:[#allocation2 + $0x58] sm:$0xff] %vm1854, %v1849
        %1867 = vst.msk [vmem:[#allocation2 + $0x60] sm:$0xff] %vm1854, %v1850
        %1868 = vst.msk [vmem:[#allocation2 + $0x68] sm:$0xff] %vm1854, %v1851
        %1869 = vst.msk [vmem:[#allocation2 + $0x70] sm:$0xff] %vm1854, %v1852
        %1870 = vst.msk [vmem:[#allocation2 + $0x78] sm:$0xff] %vm1854, %v1853
        %p1871 = scmp.eq.s32.totalorder %s14, 7
        // Predicated region
        $region78: #{tpu_custom_call.1} parent=68 // pred_check
          %p1872 = pneg %p1871
        $region79: #{tpu_custom_call.1} parent=68 // pred_check_branch
          %1874 = sbr.rel (%p1872) target = $region81
        $region80: #{tpu_custom_call.1} parent=68 // pred_region
          %v1875 = vld [vmem:[#allocation2] sm:$0xff]
          %v1876 = vld [vmem:[#allocation2 + $0x8] sm:$0xff]
          %v1877 = vld [vmem:[#allocation2 + $0x10] sm:$0xff]
          %v1878 = vld [vmem:[#allocation2 + $0x18] sm:$0xff]
          %v1879 = vld [vmem:[#allocation2 + $0x20] sm:$0xff]
          %v1880 = vld [vmem:[#allocation2 + $0x28] sm:$0xff]
          %v1881 = vld [vmem:[#allocation2 + $0x30] sm:$0xff]
          %v1882 = vld [vmem:[#allocation2 + $0x38] sm:$0xff]
          %v1883 = vld [vmem:[#allocation2 + $0x40] sm:$0xff]
          %v1884 = vld [vmem:[#allocation2 + $0x48] sm:$0xff]
          %v1885 = vld [vmem:[#allocation2 + $0x50] sm:$0xff]
          %v1886 = vld [vmem:[#allocation2 + $0x58] sm:$0xff]
          %v1887 = vld [vmem:[#allocation2 + $0x60] sm:$0xff]
          %v1888 = vld [vmem:[#allocation2 + $0x68] sm:$0xff]
          %v1889 = vld [vmem:[#allocation2 + $0x70] sm:$0xff]
          %v1890 = vld [vmem:[#allocation2 + $0x78] sm:$0xff]
          %v1891 = vld [vmem:[%s2] sm:$0xff]
          %v1892 = vld [vmem:[%s2 + $0x8] sm:$0xff]
          %v1893 = vld [vmem:[%s2 + $0x10] sm:$0xff]
          %v1894 = vld [vmem:[%s2 + $0x18] sm:$0xff]
          %v1895 = vld [vmem:[%s2 + $0x20] sm:$0xff]
          %v1896 = vld [vmem:[%s2 + $0x28] sm:$0xff]
          %v1897 = vld [vmem:[%s2 + $0x30] sm:$0xff]
          %v1898 = vld [vmem:[%s2 + $0x38] sm:$0xff]
          %v1899 = vld [vmem:[%s2 + $0x40] sm:$0xff]
          %v1900 = vld [vmem:[%s2 + $0x48] sm:$0xff]
          %v1901 = vld [vmem:[%s2 + $0x50] sm:$0xff]
          %v1902 = vld [vmem:[%s2 + $0x58] sm:$0xff]
          %v1903 = vld [vmem:[%s2 + $0x60] sm:$0xff]
          %v1904 = vld [vmem:[%s2 + $0x68] sm:$0xff]
          %v1905 = vld [vmem:[%s2 + $0x70] sm:$0xff]
          %v1906 = vld [vmem:[%s2 + $0x78] sm:$0xff]
          %1908 = vset.pattern.permute.xlu0 0
          %1909 = vperm.xlu0 %1908, %v1891
          %v1910 = vpop.permute.xlu0 %1909
          %1913 = vset.pattern.permute.xlu0 0
          %1914 = vperm.xlu0 %1913, %v1892
          %v1915 = vpop.permute.xlu0 %1914
          %1918 = vset.pattern.permute.xlu0 0
          %1919 = vperm.xlu0 %1918, %v1893
          %v1920 = vpop.permute.xlu0 %1919
          %1923 = vset.pattern.permute.xlu0 0
          %1924 = vperm.xlu0 %1923, %v1894
          %v1925 = vpop.permute.xlu0 %1924
          %1928 = vset.pattern.permute.xlu0 0
          %1929 = vperm.xlu0 %1928, %v1895
          %v1930 = vpop.permute.xlu0 %1929
          %1933 = vset.pattern.permute.xlu0 0
          %1934 = vperm.xlu0 %1933, %v1896
          %v1935 = vpop.permute.xlu0 %1934
          %1938 = vset.pattern.permute.xlu0 0
          %1939 = vperm.xlu0 %1938, %v1897
          %v1940 = vpop.permute.xlu0 %1939
          %1943 = vset.pattern.permute.xlu0 0
          %1944 = vperm.xlu0 %1943, %v1898
          %v1945 = vpop.permute.xlu0 %1944
          %1948 = vset.pattern.permute.xlu0 0
          %1949 = vperm.xlu0 %1948, %v1899
          %v1950 = vpop.permute.xlu0 %1949
          %1953 = vset.pattern.permute.xlu0 0
          %1954 = vperm.xlu0 %1953, %v1900
          %v1955 = vpop.permute.xlu0 %1954
          %1958 = vset.pattern.permute.xlu0 0
          %1959 = vperm.xlu0 %1958, %v1901
          %v1960 = vpop.permute.xlu0 %1959
          %1963 = vset.pattern.permute.xlu0 0
          %1964 = vperm.xlu0 %1963, %v1902
          %v1965 = vpop.permute.xlu0 %1964
          %1968 = vset.pattern.permute.xlu0 0
          %1969 = vperm.xlu0 %1968, %v1903
          %v1970 = vpop.permute.xlu0 %1969
          %1973 = vset.pattern.permute.xlu0 0
          %1974 = vperm.xlu0 %1973, %v1904
          %v1975 = vpop.permute.xlu0 %1974
          %1978 = vset.pattern.permute.xlu0 0
          %1979 = vperm.xlu0 %1978, %v1905
          %v1980 = vpop.permute.xlu0 %1979
          %1983 = vset.pattern.permute.xlu0 0
          %1984 = vperm.xlu0 %1983, %v1906
          %v1985 = vpop.permute.xlu0 %1984
          %v1987 = vadd.f32 %v1875, %v1910
          %v1988 = vadd.f32 %v1876, %v1915
          %v1989 = vadd.f32 %v1877, %v1920
          %v1990 = vadd.f32 %v1878, %v1925
          %v1991 = vadd.f32 %v1879, %v1930
          %v1992 = vadd.f32 %v1880, %v1935
          %v1993 = vadd.f32 %v1881, %v1940
          %v1994 = vadd.f32 %v1882, %v1945
          %v1995 = vadd.f32 %v1883, %v1950
          %v1996 = vadd.f32 %v1884, %v1955
          %v1997 = vadd.f32 %v1885, %v1960
          %v1998 = vadd.f32 %v1886, %v1965
          %v1999 = vadd.f32 %v1887, %v1970
          %v2000 = vadd.f32 %v1888, %v1975
          %v2001 = vadd.f32 %v1889, %v1980
          %v2002 = vadd.f32 %v1890, %v1985
          %v2003 = vmax.f32 %v1987, 0.0
          %v2004 = vmax.f32 %v1988, 0.0
          %v2005 = vmax.f32 %v1989, 0.0
          %v2006 = vmax.f32 %v1990, 0.0
          %v2007 = vmax.f32 %v1991, 0.0
          %v2008 = vmax.f32 %v1992, 0.0
          %v2009 = vmax.f32 %v1993, 0.0
          %v2010 = vmax.f32 %v1994, 0.0
          %v2011 = vmax.f32 %v1995, 0.0
          %v2012 = vmax.f32 %v1996, 0.0
          %v2013 = vmax.f32 %v1997, 0.0
          %v2014 = vmax.f32 %v1998, 0.0
          %v2015 = vmax.f32 %v1999, 0.0
          %v2016 = vmax.f32 %v2000, 0.0
          %v2017 = vmax.f32 %v2001, 0.0
          %v2018 = vmax.f32 %v2002, 0.0
          %vm2019 = vcmask 64512
          %2020 = vst.msk [vmem:[%s3] sm:$0xff] %vm2019, %v2003
          %2021 = vst.msk [vmem:[%s3 + $0x8] sm:$0xff] %vm2019, %v2004
          %2022 = vst.msk [vmem:[%s3 + $0x10] sm:$0xff] %vm2019, %v2005
          %2023 = vst.msk [vmem:[%s3 + $0x18] sm:$0xff] %vm2019, %v2006
          %2024 = vst.msk [vmem:[%s3 + $0x20] sm:$0xff] %vm2019, %v2007
          %2025 = vst.msk [vmem:[%s3 + $0x28] sm:$0xff] %vm2019, %v2008
          %2026 = vst.msk [vmem:[%s3 + $0x30] sm:$0xff] %vm2019, %v2009
          %2027 = vst.msk [vmem:[%s3 + $0x38] sm:$0xff] %vm2019, %v2010
          %2028 = vst.msk [vmem:[%s3 + $0x40] sm:$0xff] %vm2019, %v2011
          %2029 = vst.msk [vmem:[%s3 + $0x48] sm:$0xff] %vm2019, %v2012
          %2030 = vst.msk [vmem:[%s3 + $0x50] sm:$0xff] %vm2019, %v2013
          %2031 = vst.msk [vmem:[%s3 + $0x58] sm:$0xff] %vm2019, %v2014
          %2032 = vst.msk [vmem:[%s3 + $0x60] sm:$0xff] %vm2019, %v2015
          %2033 = vst.msk [vmem:[%s3 + $0x68] sm:$0xff] %vm2019, %v2016
          %2034 = vst.msk [vmem:[%s3 + $0x70] sm:$0xff] %vm2019, %v2017
          %2035 = vst.msk [vmem:[%s3 + $0x78] sm:$0xff] %vm2019, %v2018
        $region81: #{tpu_custom_call.1} parent=68 // pred_fallthru
          _
        // Predicated region
        $region82: #{tpu_custom_call.1} parent=68 // pred_check
          %p2036 = pneg %p95
        $region83: #{tpu_custom_call.1} parent=68 // pred_check_branch
          %2038 = sbr.rel (%p2036) target = $region85
        $region84: #{tpu_custom_call.1} parent=68 // pred_region
          _
        $region85: #{tpu_custom_call.1} parent=68 // pred_fallthru
          _
        // Predicated region
        $region86: #{tpu_custom_call.1} parent=68 // pred_check
          %p2039 = pneg %p95
        $region87: #{tpu_custom_call.1} parent=68 // pred_check_branch
          %2041 = sbr.rel (%p2039) target = $region89
        $region88: #{tpu_custom_call.1} parent=68 // pred_region
          _
        $region89: #{tpu_custom_call.1} parent=68 // pred_fallthru
          _
      $region69: #{tpu_custom_call.1} parent=5 // pred_fallthru
        _
      %p2042 = scmp.le.s32.totalorder 2, %s9
      // Predicated region
      $region90: #{tpu_custom_call.1} parent=5 // pred_check
        %p2043 = pneg %p2042
      $region91: #{tpu_custom_call.1} parent=5 // pred_check_branch
        %2045 = sbr.rel (%p2043) target = $region93
      $region92: #{tpu_custom_call.1} parent=5 // pred_region
        %s2046 = ssub.s32 %s9, 2
      $region93: #{tpu_custom_call.1} parent=5 // pred_fallthru
        _
    $region6: #{tpu_custom_call.1} parent=1 // loop_footer
      %s13 = sadd.s32 1, %s9
    $region7: #{tpu_custom_call.1} parent=1 // loop_footer_branch
      %8 = sbr.rel target = $region3
    $region8: #{tpu_custom_call.1} parent=1 // loop_exit
      _

</llo_original>
